<compile_context>
chip_gen: v6e
topology: v6e:2x2x1
jax: 0.10.0
libtpu: 0.0.40
codegen_flags: <defaults>
</compile_context>

<pallas_src>
import functools

import jax
import jax.numpy as jnp
from jax.experimental import pallas as pl
from jax.experimental.pallas import tpu as pltpu


def _round_up(x, m):
    return (x + m - 1) // m * m


# --------------------- fused stride-2 3x3 conv kernel (use_conv=True) ---------------------

def _down_conv_kernel(xm_ref, xh_ref, w_ref, b_ref, o_ref, *, th, wo):
    """One (sample, row-tile) block.
    xm: (1, th, 2, Wo+1, 2*Cin) bf16  -- phase rows [r0, r0+th) of the padded canvas
    xh: (1, 1,  2, Wo+1, 2*Cin) bf16  -- 1-row halo (phase row r0+th)
    w : (9, Cin, Cout_p) bf16         -- tap-major weights
    b : (1, Cout_p) f32
    o : (1, th*Wo, Cout_p) f32        -- lane-dense output
    """
    two_cin = xm_ref.shape[-1]
    cin = two_cin // 2
    cout_p = o_ref.shape[-1]

    # Consolidate main rows + halo row into one (th+1, 2, Wo+1, 2*Cin) value.
    x = jnp.concatenate([xm_ref[0], xh_ref[0]], axis=0)

    # Accumulator initialised from the broadcast bias (no final bias-add pass).
    acc = jnp.broadcast_to(b_ref[...], (th * wo, cout_p)).astype(jnp.float32)

    for di in range(3):
        oi, pr = di // 2, di % 2                      # phase-row offset / row parity
        for dj in range(3):
            oj, pc = dj // 2, dj % 2                  # phase-col offset / col parity
            # canvas[2*(r0+m)+di, 2*j+dj, :]  ==  x[m+oi, pr, j+oj, pc*Cin:(pc+1)*Cin]
            tap = x[oi:oi + th, pr, oj:oj + wo, pc * cin:(pc + 1) * cin]   # (th, wo, Cin)
            tap = tap.reshape(th * wo, cin)
            acc = acc + jnp.dot(tap, w_ref[di * 3 + dj],                   # bf16 x bf16
                                preferred_element_type=jnp.float32)        # -> f32 acc
    o_ref[0] = acc


def _pick_row_tile(ho, wo, cin, cout_p, budget_bytes=12 * 1024 * 1024):
    """Largest row tile th (th | Ho, 8-sublane-aligned output rows) within a VMEM budget."""
    # One padded canvas phase-row (both parities), bf16, lane/sublane padded estimate.
    row = 2 * _round_up(wo + 1, 16) * _round_up(2 * cin, 128) * 2

    def tile_bytes(th):
        a_main = th * row
        a_halo = row
        out = th * wo * cout_p * 4
        tmp = (th + 1) * row + 2 * th * wo * cout_p * 4   # concat value + f32 acc temps
        return 2 * (a_main + a_halo) + 2 * out + tmp       # double-buffered I/O + temps

    valid = [t for t in range(1, ho + 1)
             if ho % t == 0 and ((t * wo) % 8 == 0 or t == ho)]
    fitting = [t for t in valid if tile_bytes(t) <= budget_bytes]
    return max(fitting) if fitting else min(valid)


def downsample_conv(x_nhwc, w_oihw, b, *, padding=1, row_tile=None):
    """3x3 stride-2 conv (NHWC activations, PyTorch OIHW weights) via Pallas."""
    N, H, W, Cin = x_nhwc.shape
    Cout = w_oihw.shape[0]
    Ho = (H + 2 * padding - 3) // 2 + 1
    Wo = (W + 2 * padding - 3) // 2 + 1
    Cout_p = _round_up(Cout, 128)                          # lane-dense output width
    Hp, Wp = 2 * (Ho + 1), 2 * (Wo + 1)                    # even zero-padded canvas
    assert padding + H <= Hp and padding + W <= Wp, (H, W, padding, Hp, Wp)

    # Single HBM pass over x: cast to bf16 while zero-padding onto the even canvas.
    # The phase view below is a free row-major reshape (no strided HBM copies).
    xp = jnp.pad(x_nhwc.astype(jnp.bfloat16),
                 ((0, 0), (padding, Hp - H - padding), (padding, Wp - W - padding), (0, 0)))
    xv = xp.reshape(N, Ho + 1, 2, Wo + 1, 2 * Cin)         # canvas[2a+p, 2b+q, c] = xv[a,p,b,q*Cin+c]

    # OIHW -> (kh*kw, Cin, Cout_p) bf16, zero-padded Cout.
    w_hwio = jnp.transpose(w_oihw, (2, 3, 1, 0)).reshape(9, Cin, Cout)
    w_p = jnp.zeros((9, Cin, Cout_p), jnp.bfloat16).at[:, :, :Cout].set(
        w_hwio.astype(jnp.bfloat16))
    b_p = jnp.zeros((1, Cout_p), jnp.float32).at[:, :Cout].set(b.astype(jnp.float32))

    th = row_tile if row_tile is not None else _pick_row_tile(Ho, Wo, Cin, Cout_p)
    assert Ho % th == 0 and ((th * Wo) % 8 == 0 or th == Ho), (Ho, Wo, th)
    nb = Ho // th

    flops = 2 * N * Ho * Wo * 9 * Cin * Cout_p
    bytes_accessed = (2 * N * (Ho + 1) * 2 * (Wo + 1) * 2 * Cin   # bf16 canvas
                      + 2 * 9 * Cin * Cout_p                      # bf16 weights
                      + 4 * N * Ho * Wo * Cout_p)                 # f32 output

    out = pl.pallas_call(
        functools.partial(_down_conv_kernel, th=th, wo=Wo),
        out_shape=jax.ShapeDtypeStruct((N, Ho * Wo, Cout_p), jnp.float32),
        grid=(N, nb),
        in_specs=[
            # main activation block: phase rows [i*th, (i+1)*th)
            pl.BlockSpec((1, th, 2, Wo + 1, 2 * Cin), lambda n, i: (n, i, 0, 0, 0)),
            # 1-row halo: phase row (i+1)*th (block size 1 -> block index == row index)
            pl.BlockSpec((1, 1, 2, Wo + 1, 2 * Cin),
                         lambda n, i: (n, (i + 1) * th, 0, 0, 0)),
            pl.BlockSpec((9, Cin, Cout_p), lambda n, i: (0, 0, 0)),
            pl.BlockSpec((1, Cout_p), lambda n, i: (0, 0)),
        ],
        out_specs=pl.BlockSpec((1, th * Wo, Cout_p), lambda n, i: (n, i, 0)),
        compiler_params=pltpu.CompilerParams(
            dimension_semantics=("parallel", "parallel"),
            vmem_limit_bytes=32 * 1024 * 1024),
        cost_estimate=pl.CostEstimate(flops=flops, transcendentals=0,
                                      bytes_accessed=bytes_accessed),
    )(xv, xv, w_p, b_p)

    if Cout_p != Cout:
        out = out[:, :, :Cout]
    return out.reshape(N, Ho, Wo, Cout)


# ------------------------- 2x2 stride-2 average pool (use_conv=False) ---------------------

def _avgpool_kernel(x_ref, o_ref):
    c = o_ref.shape[-1]
    x = x_ref[0].astype(jnp.float32)                         # (th, 2, Wo, 2*C)
    s = (x[:, 0, :, :c] + x[:, 0, :, c:] + x[:, 1, :, :c] + x[:, 1, :, c:])
    o_ref[0] = (0.25 * s).astype(o_ref.dtype)


def downsample_avgpool(x_nhwc, *, row_tile=None):
    """2x2 stride-2 average pool, NHWC, output in the input dtype."""
    N, H, W, C = x_nhwc.shape
    Ho, Wo = H // 2, W // 2
    # Free view when H, W are even (floor behaviour matches AvgPool2d(2, 2) otherwise).
    xv = x_nhwc[:, :2 * Ho, :2 * Wo, :].reshape(N, Ho, 2, Wo, 2 * C)

    if row_tile is None:
        itemsize = jnp.dtype(x_nhwc.dtype).itemsize
        bytes_per_row = (2 * 2 * Wo * C + Wo * C) * itemsize
        cap = max(1, (4 * 1024 * 1024) // max(bytes_per_row, 1))
        divisors = [t for t in range(1, Ho + 1) if Ho % t == 0]
        row_tile = max([t for t in divisors if t <= cap] or [1])
    assert Ho % row_tile == 0, (Ho, row_tile)
    nb = Ho // row_tile

    return pl.pallas_call(
        _avgpool_kernel,
        out_shape=jax.ShapeDtypeStruct((N, Ho, Wo, C), x_nhwc.dtype),
        grid=(N, nb),
        in_specs=[pl.BlockSpec((1, row_tile, 2, Wo, 2 * C),
                               lambda n, i: (n, i, 0, 0, 0))],
        out_specs=pl.BlockSpec((1, row_tile, Wo, C), lambda n, i: (n, i, 0, 0)),
        compiler_params=pltpu.CompilerParams(
            dimension_semantics=("parallel", "parallel"),
            vmem_limit_bytes=32 * 1024 * 1024),
    )(xv)


# ----------------------------------- module wrapper --------------------------------------

def downsample_forward(params, x_nchw, *, use_conv, padding=1):
    """Equivalent of Downsample.forward (dims=2). x: NCHW."""
    channels = params['channels']
    assert x_nchw.shape[1] == channels
    x = jnp.transpose(x_nchw, (0, 2, 3, 1))                  # NCHW -> NHWC
    if use_conv:
        y = downsample_conv(x, params['w'], params['b'], padding=padding)
    else:
        assert channels == params['out_channels']
        y = downsample_avgpool(x)
    return jnp.transpose(y, (0, 3, 1, 2))                    # NHWC -> NCHW


# ---------------------------------------- main --------------------------------------------

if __name__ == "__main__":
    key = jax.random.PRNGKey(0)
    k_x, k_w, k_b = jax.random.split(key, 3)
    N, C, H, W = 2, 64, 16, 16
    x = jax.random.normal(k_x, (N, C, H, W), jnp.float32)
    w = jax.random.normal(k_w, (C, C, 3, 3), jnp.float32) * 0.05
    b = jax.random.normal(k_b, (C,), jnp.float32) * 0.05
    params = {'channels': C, 'out_channels': C, 'w': w, 'b': b}

    # f32 reference for nn.Conv2d(C, C, 3, stride=2, padding=1).
    ref = jax.lax.conv_general_dilated(
        jnp.transpose(x, (0, 2, 3, 1)), jnp.transpose(w, (2, 3, 1, 0)),
        window_strides=(2, 2), padding=((1, 1), (1, 1)),
        dimension_numbers=('NHWC', 'HWIO', 'NHWC')) + b
    ref = jnp.transpose(ref, (0, 3, 1, 2))

    # use_conv=True path, default (whole-sample) row tiling.
    y_conv = jax.block_until_ready(downsample_forward(params, x, use_conv=True))
    assert y_conv.shape == (N, C, H // 2, W // 2), y_conv.shape
    rel_err = float(jnp.max(jnp.abs(y_conv - ref)) / (jnp.max(jnp.abs(ref)) + 1e-6))
    assert rel_err < 5e-2, rel_err          # bf16 MXU operands, f32 accumulation

    # Same conv with a forced small row tile (exercises the multi-tile + halo path).
    x_nhwc = jnp.transpose(x, (0, 2, 3, 1))
    y_tiled = jnp.transpose(
        jax.block_until_ready(downsample_conv(x_nhwc, w, b, padding=1, row_tile=2)),
        (0, 3, 1, 2))
    rel_err_t = float(jnp.max(jnp.abs(y_tiled - ref)) / (jnp.max(jnp.abs(ref)) + 1e-6))
    assert rel_err_t < 5e-2, rel_err_t

    # use_conv=False path (AvgPool2d(kernel_size=2, stride=2)).
    y_pool = jax.block_until_ready(downsample_forward(params, x, use_conv=False))
    assert y_pool.shape == (N, C, H // 2, W // 2), y_pool.shape
    ref_pool = x.reshape(N, C, H // 2, 2, W // 2, 2).mean(axis=(3, 5))
    assert float(jnp.max(jnp.abs(y_pool - ref_pool))) < 1e-5

    print("KERNEL_OK")
</pallas_src>

<mosaic_0001>
module attributes {stable_mosaic.version = 11 : i64} {
  func.func @_down_conv_kernel(%arg0: i32, %arg1: i32, %arg2: memref<1x8x2x9x128xbf16, #tpu.memory_space<vmem>>, %arg3: memref<1x1x2x9x128xbf16, #tpu.memory_space<vmem>>, %arg4: memref<9x64x128xbf16, #tpu.memory_space<vmem>>, %arg5: memref<1x128xf32, #tpu.memory_space<vmem>>, %arg6: memref<1x64x128xf32, #tpu.memory_space<vmem>>) attributes {dimension_semantics = [#tpu.dimension_semantics<parallel>, #tpu.dimension_semantics<parallel>], iteration_bounds = array<i64: 2, 1>, scalar_prefetch = 0 : i64, scratch_operands = 0 : i64, tpu.core_type = #tpu.core_type<tc>, window_params = [{transform_indices = @transform_0, window_bounds = array<i64: 1, 8, 2, 9, 128>}, {transform_indices = @transform_1, window_bounds = array<i64: 1, 1, 2, 9, 128>}, {pipeline_mode = #tpu.pipeline_mode<synchronous>, transform_indices = @transform_2, window_bounds = array<i64: 9, 64, 128>}, {pipeline_mode = #tpu.pipeline_mode<synchronous>, transform_indices = @transform_3, window_bounds = array<i64: 1, 128>}, {transform_indices = @transform_4, window_bounds = array<i64: 1, 64, 128>}]} {
    %c0 = arith.constant 0 : index
    %c0_0 = arith.constant 0 : index
    %c0_1 = arith.constant 0 : index
    %c0_2 = arith.constant 0 : index
    %c0_3 = arith.constant 0 : index
    %0 = vector.load %arg2[%c0, %c0_0, %c0_1, %c0_2, %c0_3] : memref<1x8x2x9x128xbf16, #tpu.memory_space<vmem>>, vector<1x8x2x9x128xbf16>
    %1 = vector.shape_cast %0 : vector<1x8x2x9x128xbf16> to vector<8x2x9x128xbf16>
    %c0_4 = arith.constant 0 : index
    %c0_5 = arith.constant 0 : index
    %c0_6 = arith.constant 0 : index
    %c0_7 = arith.constant 0 : index
    %c0_8 = arith.constant 0 : index
    %2 = vector.load %arg3[%c0_4, %c0_5, %c0_6, %c0_7, %c0_8] : memref<1x1x2x9x128xbf16, #tpu.memory_space<vmem>>, vector<1x1x2x9x128xbf16>
    %3 = vector.shape_cast %2 : vector<1x1x2x9x128xbf16> to vector<1x2x9x128xbf16>
    %4 = tpu.concatenate %1, %3 in 0 : vector<8x2x9x128xbf16>, vector<1x2x9x128xbf16> -> vector<9x2x9x128xbf16>
    %c0_9 = arith.constant 0 : index
    %c0_10 = arith.constant 0 : index
    %5 = vector.load %arg5[%c0_9, %c0_10] : memref<1x128xf32, #tpu.memory_space<vmem>>, vector<1x128xf32>
    %6 = vector.shape_cast %5 : vector<1x128xf32> to vector<1x128xf32>
    %7 = vector.broadcast %6 : vector<1x128xf32> to vector<64x128xf32>
    %8 = vector.extract_strided_slice %4 {offsets = [0, 0, 0, 0], sizes = [8, 1, 8, 64], strides = [1, 1, 1, 1]} : vector<9x2x9x128xbf16> to vector<8x1x8x64xbf16>
    %9 = vector.shape_cast %8 : vector<8x1x8x64xbf16> to vector<8x8x64xbf16>
    %10 = vector.shape_cast %9 : vector<8x8x64xbf16> to vector<64x64xbf16>
    %c0_11 = arith.constant 0 : index
    %c0_12 = arith.constant 0 : index
    %c0_13 = arith.constant 0 : index
    %11 = vector.load %arg4[%c0_11, %c0_12, %c0_13] : memref<9x64x128xbf16, #tpu.memory_space<vmem>>, vector<1x64x128xbf16>
    %12 = vector.shape_cast %11 : vector<1x64x128xbf16> to vector<64x128xbf16>
    %cst = arith.constant dense<0.000000e+00> : vector<64x128xf32>
    %13 = tpu.matmul %10, %12, %cst {dimension_numbers = #tpu.dot_dimension_numbers<[1], [0], [0], [1], [0, 0, 1, 1], [], []>} : vector<64x64xbf16>, vector<64x128xbf16>, vector<64x128xf32> -> vector<64x128xf32>
    %14 = arith.addf %7, %13 : vector<64x128xf32>
    %15 = vector.extract_strided_slice %4 {offsets = [0, 0, 0, 64], sizes = [8, 1, 8, 64], strides = [1, 1, 1, 1]} : vector<9x2x9x128xbf16> to vector<8x1x8x64xbf16>
    %16 = vector.shape_cast %15 : vector<8x1x8x64xbf16> to vector<8x8x64xbf16>
    %17 = vector.shape_cast %16 : vector<8x8x64xbf16> to vector<64x64xbf16>
    %c1 = arith.constant 1 : index
    %c0_14 = arith.constant 0 : index
    %c0_15 = arith.constant 0 : index
    %18 = vector.load %arg4[%c1, %c0_14, %c0_15] : memref<9x64x128xbf16, #tpu.memory_space<vmem>>, vector<1x64x128xbf16>
    %19 = vector.shape_cast %18 : vector<1x64x128xbf16> to vector<64x128xbf16>
    %cst_16 = arith.constant dense<0.000000e+00> : vector<64x128xf32>
    %20 = tpu.matmul %17, %19, %cst_16 {dimension_numbers = #tpu.dot_dimension_numbers<[1], [0], [0], [1], [0, 0, 1, 1], [], []>} : vector<64x64xbf16>, vector<64x128xbf16>, vector<64x128xf32> -> vector<64x128xf32>
    %21 = arith.addf %14, %20 : vector<64x128xf32>
    %22 = vector.extract_strided_slice %4 {offsets = [0, 0, 1, 0], sizes = [8, 1, 8, 64], strides = [1, 1, 1, 1]} : vector<9x2x9x128xbf16> to vector<8x1x8x64xbf16>
    %23 = vector.shape_cast %22 : vector<8x1x8x64xbf16> to vector<8x8x64xbf16>
    %24 = vector.shape_cast %23 : vector<8x8x64xbf16> to vector<64x64xbf16>
    %c2 = arith.constant 2 : index
    %c0_17 = arith.constant 0 : index
    %c0_18 = arith.constant 0 : index
    %25 = vector.load %arg4[%c2, %c0_17, %c0_18] : memref<9x64x128xbf16, #tpu.memory_space<vmem>>, vector<1x64x128xbf16>
    %26 = vector.shape_cast %25 : vector<1x64x128xbf16> to vector<64x128xbf16>
    %cst_19 = arith.constant dense<0.000000e+00> : vector<64x128xf32>
    %27 = tpu.matmul %24, %26, %cst_19 {dimension_numbers = #tpu.dot_dimension_numbers<[1], [0], [0], [1], [0, 0, 1, 1], [], []>} : vector<64x64xbf16>, vector<64x128xbf16>, vector<64x128xf32> -> vector<64x128xf32>
    %28 = arith.addf %21, %27 : vector<64x128xf32>
    %29 = vector.extract_strided_slice %4 {offsets = [0, 1, 0, 0], sizes = [8, 1, 8, 64], strides = [1, 1, 1, 1]} : vector<9x2x9x128xbf16> to vector<8x1x8x64xbf16>
    %30 = vector.shape_cast %29 : vector<8x1x8x64xbf16> to vector<8x8x64xbf16>
    %31 = vector.shape_cast %30 : vector<8x8x64xbf16> to vector<64x64xbf16>
    %c3 = arith.constant 3 : index
    %c0_20 = arith.constant 0 : index
    %c0_21 = arith.constant 0 : index
    %32 = vector.load %arg4[%c3, %c0_20, %c0_21] : memref<9x64x128xbf16, #tpu.memory_space<vmem>>, vector<1x64x128xbf16>
    %33 = vector.shape_cast %32 : vector<1x64x128xbf16> to vector<64x128xbf16>
    %cst_22 = arith.constant dense<0.000000e+00> : vector<64x128xf32>
    %34 = tpu.matmul %31, %33, %cst_22 {dimension_numbers = #tpu.dot_dimension_numbers<[1], [0], [0], [1], [0, 0, 1, 1], [], []>} : vector<64x64xbf16>, vector<64x128xbf16>, vector<64x128xf32> -> vector<64x128xf32>
    %35 = arith.addf %28, %34 : vector<64x128xf32>
    %36 = vector.extract_strided_slice %4 {offsets = [0, 1, 0, 64], sizes = [8, 1, 8, 64], strides = [1, 1, 1, 1]} : vector<9x2x9x128xbf16> to vector<8x1x8x64xbf16>
    %37 = vector.shape_cast %36 : vector<8x1x8x64xbf16> to vector<8x8x64xbf16>
    %38 = vector.shape_cast %37 : vector<8x8x64xbf16> to vector<64x64xbf16>
    %c4 = arith.constant 4 : index
    %c0_23 = arith.constant 0 : index
    %c0_24 = arith.constant 0 : index
    %39 = vector.load %arg4[%c4, %c0_23, %c0_24] : memref<9x64x128xbf16, #tpu.memory_space<vmem>>, vector<1x64x128xbf16>
    %40 = vector.shape_cast %39 : vector<1x64x128xbf16> to vector<64x128xbf16>
    %cst_25 = arith.constant dense<0.000000e+00> : vector<64x128xf32>
    %41 = tpu.matmul %38, %40, %cst_25 {dimension_numbers = #tpu.dot_dimension_numbers<[1], [0], [0], [1], [0, 0, 1, 1], [], []>} : vector<64x64xbf16>, vector<64x128xbf16>, vector<64x128xf32> -> vector<64x128xf32>
    %42 = arith.addf %35, %41 : vector<64x128xf32>
    %43 = vector.extract_strided_slice %4 {offsets = [0, 1, 1, 0], sizes = [8, 1, 8, 64], strides = [1, 1, 1, 1]} : vector<9x2x9x128xbf16> to vector<8x1x8x64xbf16>
    %44 = vector.shape_cast %43 : vector<8x1x8x64xbf16> to vector<8x8x64xbf16>
    %45 = vector.shape_cast %44 : vector<8x8x64xbf16> to vector<64x64xbf16>
    %c5 = arith.constant 5 : index
    %c0_26 = arith.constant 0 : index
    %c0_27 = arith.constant 0 : index
    %46 = vector.load %arg4[%c5, %c0_26, %c0_27] : memref<9x64x128xbf16, #tpu.memory_space<vmem>>, vector<1x64x128xbf16>
    %47 = vector.shape_cast %46 : vector<1x64x128xbf16> to vector<64x128xbf16>
    %cst_28 = arith.constant dense<0.000000e+00> : vector<64x128xf32>
    %48 = tpu.matmul %45, %47, %cst_28 {dimension_numbers = #tpu.dot_dimension_numbers<[1], [0], [0], [1], [0, 0, 1, 1], [], []>} : vector<64x64xbf16>, vector<64x128xbf16>, vector<64x128xf32> -> vector<64x128xf32>
    %49 = arith.addf %42, %48 : vector<64x128xf32>
    %50 = vector.extract_strided_slice %4 {offsets = [1, 0, 0, 0], sizes = [8, 1, 8, 64], strides = [1, 1, 1, 1]} : vector<9x2x9x128xbf16> to vector<8x1x8x64xbf16>
    %51 = vector.shape_cast %50 : vector<8x1x8x64xbf16> to vector<8x8x64xbf16>
    %52 = vector.shape_cast %51 : vector<8x8x64xbf16> to vector<64x64xbf16>
    %c6 = arith.constant 6 : index
    %c0_29 = arith.constant 0 : index
    %c0_30 = arith.constant 0 : index
    %53 = vector.load %arg4[%c6, %c0_29, %c0_30] : memref<9x64x128xbf16, #tpu.memory_space<vmem>>, vector<1x64x128xbf16>
    %54 = vector.shape_cast %53 : vector<1x64x128xbf16> to vector<64x128xbf16>
    %cst_31 = arith.constant dense<0.000000e+00> : vector<64x128xf32>
    %55 = tpu.matmul %52, %54, %cst_31 {dimension_numbers = #tpu.dot_dimension_numbers<[1], [0], [0], [1], [0, 0, 1, 1], [], []>} : vector<64x64xbf16>, vector<64x128xbf16>, vector<64x128xf32> -> vector<64x128xf32>
    %56 = arith.addf %49, %55 : vector<64x128xf32>
    %57 = vector.extract_strided_slice %4 {offsets = [1, 0, 0, 64], sizes = [8, 1, 8, 64], strides = [1, 1, 1, 1]} : vector<9x2x9x128xbf16> to vector<8x1x8x64xbf16>
    %58 = vector.shape_cast %57 : vector<8x1x8x64xbf16> to vector<8x8x64xbf16>
    %59 = vector.shape_cast %58 : vector<8x8x64xbf16> to vector<64x64xbf16>
    %c7 = arith.constant 7 : index
    %c0_32 = arith.constant 0 : index
    %c0_33 = arith.constant 0 : index
    %60 = vector.load %arg4[%c7, %c0_32, %c0_33] : memref<9x64x128xbf16, #tpu.memory_space<vmem>>, vector<1x64x128xbf16>
    %61 = vector.shape_cast %60 : vector<1x64x128xbf16> to vector<64x128xbf16>
    %cst_34 = arith.constant dense<0.000000e+00> : vector<64x128xf32>
    %62 = tpu.matmul %59, %61, %cst_34 {dimension_numbers = #tpu.dot_dimension_numbers<[1], [0], [0], [1], [0, 0, 1, 1], [], []>} : vector<64x64xbf16>, vector<64x128xbf16>, vector<64x128xf32> -> vector<64x128xf32>
    %63 = arith.addf %56, %62 : vector<64x128xf32>
    %64 = vector.extract_strided_slice %4 {offsets = [1, 0, 1, 0], sizes = [8, 1, 8, 64], strides = [1, 1, 1, 1]} : vector<9x2x9x128xbf16> to vector<8x1x8x64xbf16>
    %65 = vector.shape_cast %64 : vector<8x1x8x64xbf16> to vector<8x8x64xbf16>
    %66 = vector.shape_cast %65 : vector<8x8x64xbf16> to vector<64x64xbf16>
    %c8 = arith.constant 8 : index
    %c0_35 = arith.constant 0 : index
    %c0_36 = arith.constant 0 : index
    %67 = vector.load %arg4[%c8, %c0_35, %c0_36] : memref<9x64x128xbf16, #tpu.memory_space<vmem>>, vector<1x64x128xbf16>
    %68 = vector.shape_cast %67 : vector<1x64x128xbf16> to vector<64x128xbf16>
    %cst_37 = arith.constant dense<0.000000e+00> : vector<64x128xf32>
    %69 = tpu.matmul %66, %68, %cst_37 {dimension_numbers = #tpu.dot_dimension_numbers<[1], [0], [0], [1], [0, 0, 1, 1], [], []>} : vector<64x64xbf16>, vector<64x128xbf16>, vector<64x128xf32> -> vector<64x128xf32>
    %70 = arith.addf %63, %69 : vector<64x128xf32>
    %c0_38 = arith.constant 0 : index
    %c0_39 = arith.constant 0 : index
    %c0_40 = arith.constant 0 : index
    %71 = vector.load %arg6[%c0_38, %c0_39, %c0_40] : memref<1x64x128xf32, #tpu.memory_space<vmem>>, vector<1x64x128xf32>
    %72 = vector.shape_cast %71 : vector<1x64x128xf32> to vector<64x128xf32>
    %73 = vector.shape_cast %70 : vector<64x128xf32> to vector<1x64x128xf32>
    tpu.vector_store %arg6[%c0_38, %c0_39, %c0_40], %73 {strides = array<i32>} : memref<1x64x128xf32, #tpu.memory_space<vmem>>, vector<1x64x128xf32>,
    return
  }
  func.func @transform_0(%arg0: i32, %arg1: i32) -> (i32, i32, i32, i32, i32) {
    %c0_i32 = arith.constant 0 : i32
    %c0_i32_0 = arith.constant 0 : i32
    %c0_i32_1 = arith.constant 0 : i32
    %c0_i32_2 = arith.constant 0 : i32
    return %arg0, %arg1, %c0_i32, %c0_i32_0, %c0_i32_1 : i32, i32, i32, i32, i32
  }
  func.func @transform_1(%arg0: i32, %arg1: i32) -> (i32, i32, i32, i32, i32) {
    %c1_i32 = arith.constant 1 : i32
    %0 = arith.addi %arg1, %c1_i32 : i32
    %c8_i32 = arith.constant 8 : i32
    %1 = arith.muli %0, %c8_i32 : i32
    %c0_i32 = arith.constant 0 : i32
    %c0_i32_0 = arith.constant 0 : i32
    %c0_i32_1 = arith.constant 0 : i32
    %c0_i32_2 = arith.constant 0 : i32
    return %arg0, %1, %c0_i32, %c0_i32_0, %c0_i32_1 : i32, i32, i32, i32, i32
  }
  func.func @transform_2(%arg0: i32, %arg1: i32) -> (i32, i32, i32) {
    %c0_i32 = arith.constant 0 : i32
    %c0_i32_0 = arith.constant 0 : i32
    %c0_i32_1 = arith.constant 0 : i32
    %c0_i32_2 = arith.constant 0 : i32
    return %c0_i32, %c0_i32_0, %c0_i32_1 : i32, i32, i32
  }
  func.func @transform_3(%arg0: i32, %arg1: i32) -> (i32, i32) {
    %c0_i32 = arith.constant 0 : i32
    %c0_i32_0 = arith.constant 0 : i32
    %c0_i32_1 = arith.constant 0 : i32
    return %c0_i32, %c0_i32_0 : i32, i32
  }
  func.func @transform_4(%arg0: i32, %arg1: i32) -> (i32, i32, i32) {
    %c0_i32 = arith.constant 0 : i32
    %c0_i32_0 = arith.constant 0 : i32
    return %arg0, %arg1, %c0_i32 : i32, i32, i32
  }
}

</mosaic_0001>

<llo_original>
// kernel: tpu_custom_call.1
$region0: #{tpu_custom_call.1}
  #allocation0 [shape = 'u32[]', space=smem, size = 0x4, offset = 0x4, fixed_abs, tag = 'smem constant byte address 0x4 - core index']
  #allocation1 [shape = 'u32[144,128]{1,0:T(1,128)}', space=vmem, size = 0x12000, scoped, tag = 'internal scratch']
  %s0 = inlined_call_operand.vmem [shape: bf16[2,9,2,9,128], index: 0, kind: input, shape index: {}]
  %s1 = inlined_call_operand.vmem [shape: bf16[2,9,2,9,128], index: 1, kind: input, shape index: {}]
  %s2 = inlined_call_operand.vmem [shape: bf16[9,64,128], index: 2, kind: input, shape index: {}]
  %s3 = inlined_call_operand.vmem [shape: f32[1,128], index: 3, kind: input, shape index: {}]
  %s4 = inlined_call_operand.hbm [shape: f32[2,64,128], index: 4, kind: output, shape index: {}]
  %s5 = sld [smem:[#allocation0]]
  $region49: #{tpu_custom_call.1} parent=0
    _
  %s7 = ssub.s32 1, %s5
  %s8 = scalar_select 0, %s7, %s5
  $region1: #{tpu_custom_call.1} parent=0
    #allocation2 [shape = 'u8[65536]{0}', space=vmem, size = 0x10000, scoped, tag = 'output window, operand 0']
    #allocation3 [shape = 's32[2]{0}', space=sflag, size = 0x8, scoped, tag = 'scoped memory for tpu_custom_call.1']
    %9 = vsyncpa [#allocation3], 0
    %s10 = scalar_lea.sflag [#allocation3], 1
    %11 = vsyncpa %s10, 0
    loop: start=0, step=1, limit=4
    $region2: #{tpu_custom_call.1} parent=1 // loop_pre_header
      _
    $region3: #{tpu_custom_call.1} parent=1 // loop_header
      %s13 = sphi 0, %s17
      %p14 = scmp.ge.s32.totalorder %s13, 4
      %s20 = sphi 0, %s32
      %s21 = sphi 0, %s28
      %s22 = sphi 0, %s20
      %s23 = sphi 0, %s21
      %s24 = sphi 0, %s22
      %s25 = sphi 0, %s23
      %s37 = sphi 0, %s39
      %s40 = sphi 0, %s37
      %s41 = sphi 0, %s40
      %s57 = sphi 0, %s41
      %s69 = sphi 0, %s71
      %s72 = sphi 0, %s69
      %s73 = sphi 0, %s72
      %s89 = sphi 0, %s73
      %s93 = sphi 0, %s93
      %s95 = sphi 0, %s93
      %s96 = sphi 0, %s95
      %s110 = sphi 0, %s96
      %s114 = sphi 0, %s114
      %s116 = sphi 0, %s114
      %s117 = sphi 0, %s116
      %s131 = sphi 0, %s117
      %s139 = sphi 0, %s141
      %s142 = sphi 0, %s139
      %s143 = sphi 0, %s142
      %s159 = sphi 0, %s143
    $region4: #{tpu_custom_call.1} parent=1 // loop_header_branch
      %16 = sbr.rel (%p14) target = $region8
    $region5: #{tpu_custom_call.1} parent=1 // loop_body
      %s18 = ssub.s32 %s13, 1
      %s19 = ssub.s32 %s13, 2
      %s26 = sadd.s32 1, %s21
      %p27 = scmp.ge.s32.totalorder %s26, 1
      %s28 = scalar_select %p27, 0, %s26
      %s29 = sadd.s32 1, %s20
      %s30 = scalar_select %p27, %s29, %s20
      %p31 = scmp.ge.s32.totalorder %s30, 2
      %s32 = scalar_select %p31, 0, %s30
      %s33 = ssub.s32 %s20, %s32
      %s34 = ssub.s32 %s21, %s28
      %s35 = sor.u32 %s33, %s34
      %p36 = scmp.eq.s32.totalorder %s35, 0
      %s38 = sadd.s32 %s37, 1
      %s39 = scalar_select %p36, %s37, %s38
      %p42 = pneg %p36
      %p43 = scmp.eq.s32.totalorder %s13, 1
      %p44 = por %p42, %p43
      %p45 = scmp.ne.s32.totalorder %s37, %s40
      %p46 = scmp.eq.s32.totalorder %s13, 0
      %p47 = por %p45, %p46
      %p48 = scmp.ne.s32.totalorder %s37, %s40
      %p49 = scmp.eq.s32.totalorder %s18, 1
      %p50 = por %p48, %p49
      %p51 = scmp.ne.s32.totalorder %s40, %s41
      %p52 = scmp.eq.s32.totalorder %s18, 0
      %p53 = por %p51, %p52
      %p54 = scmp.ne.s32.totalorder %s40, %s41
      %p55 = scmp.eq.s32.totalorder %s19, 1
      %p56 = por %p54, %p55
      %p58 = scmp.ne.s32.totalorder %s41, %s57
      %p59 = scmp.eq.s32.totalorder %s19, 0
      %p60 = por %p58, %p59
      %s61 = sadd.s32 %s21, 1
      %s62 = smul.u32 %s61, 8
      %s63 = sadd.s32 %s28, 1
      %s64 = smul.u32 %s63, 8
      %s65 = ssub.s32 %s20, %s32
      %s66 = ssub.s32 %s62, %s64
      %s67 = sor.u32 %s65, %s66
      %p68 = scmp.eq.s32.totalorder %s67, 0
      %s70 = sadd.s32 %s69, 1
      %s71 = scalar_select %p68, %s69, %s70
      %p74 = pneg %p68
      %p75 = scmp.eq.s32.totalorder %s13, 1
      %p76 = por %p74, %p75
      %p77 = scmp.ne.s32.totalorder %s69, %s72
      %p78 = scmp.eq.s32.totalorder %s13, 0
      %p79 = por %p77, %p78
      %p80 = scmp.ne.s32.totalorder %s69, %s72
      %p81 = scmp.eq.s32.totalorder %s18, 1
      %p82 = por %p80, %p81
      %p83 = scmp.ne.s32.totalorder %s72, %s73
      %p84 = scmp.eq.s32.totalorder %s18, 0
      %p85 = por %p83, %p84
      %p86 = scmp.ne.s32.totalorder %s72, %s73
      %p87 = scmp.eq.s32.totalorder %s19, 1
      %p88 = por %p86, %p87
      %p90 = scmp.ne.s32.totalorder %s73, %s89
      %p91 = scmp.eq.s32.totalorder %s19, 0
      %p92 = por %p90, %p91
      %s94 = sadd.s32 %s93, 1
      %p97 = scmp.eq.s32.totalorder %s13, 1
      %p98 = scmp.ne.s32.totalorder %s93, %s95
      %p99 = scmp.eq.s32.totalorder %s13, 0
      %p100 = por %p98, %p99
      %p101 = scmp.ne.s32.totalorder %s93, %s95
      %p102 = scmp.eq.s32.totalorder %s18, 1
      %p103 = por %p101, %p102
      %p104 = scmp.ne.s32.totalorder %s95, %s96
      %p105 = scmp.eq.s32.totalorder %s18, 0
      %p106 = por %p104, %p105
      %p107 = scmp.ne.s32.totalorder %s95, %s96
      %p108 = scmp.eq.s32.totalorder %s19, 1
      %p109 = por %p107, %p108
      %p111 = scmp.ne.s32.totalorder %s96, %s110
      %p112 = scmp.eq.s32.totalorder %s19, 0
      %p113 = por %p111, %p112
      %s115 = sadd.s32 %s114, 1
      %p118 = scmp.eq.s32.totalorder %s13, 1
      %p119 = scmp.ne.s32.totalorder %s114, %s116
      %p120 = scmp.eq.s32.totalorder %s13, 0
      %p121 = por %p119, %p120
      %p122 = scmp.ne.s32.totalorder %s114, %s116
      %p123 = scmp.eq.s32.totalorder %s18, 1
      %p124 = por %p122, %p123
      %p125 = scmp.ne.s32.totalorder %s116, %s117
      %p126 = scmp.eq.s32.totalorder %s18, 0
      %p127 = por %p125, %p126
      %p128 = scmp.ne.s32.totalorder %s116, %s117
      %p129 = scmp.eq.s32.totalorder %s19, 1
      %p130 = por %p128, %p129
      %p132 = scmp.ne.s32.totalorder %s117, %s131
      %p133 = scmp.eq.s32.totalorder %s19, 0
      %p134 = por %p132, %p133
      %s135 = ssub.s32 %s20, %s32
      %s136 = ssub.s32 %s21, %s28
      %s137 = sor.u32 %s135, %s136
      %p138 = scmp.eq.s32.totalorder %s137, 0
      %s140 = sadd.s32 %s139, 1
      %s141 = scalar_select %p138, %s139, %s140
      %p144 = pneg %p138
      %p145 = scmp.eq.s32.totalorder %s13, 1
      %p146 = por %p144, %p145
      %p147 = scmp.ne.s32.totalorder %s139, %s142
      %p148 = scmp.eq.s32.totalorder %s13, 0
      %p149 = por %p147, %p148
      %p150 = scmp.ne.s32.totalorder %s139, %s142
      %p151 = scmp.eq.s32.totalorder %s18, 1
      %p152 = por %p150, %p151
      %p153 = scmp.ne.s32.totalorder %s142, %s143
      %p154 = scmp.eq.s32.totalorder %s18, 0
      %p155 = por %p153, %p154
      %p156 = scmp.ne.s32.totalorder %s142, %s143
      %p157 = scmp.eq.s32.totalorder %s19, 1
      %p158 = por %p156, %p157
      %p160 = scmp.ne.s32.totalorder %s143, %s159
      %p161 = scmp.eq.s32.totalorder %s19, 0
      %p162 = por %p160, %p161
      %p163 = scmp.le.s32.totalorder 1, %s13
      %p164 = scmp.lt.s32.totalorder %s13, 3
      %p165 = pnand %p163, %p164
      %p166 = pneg %p165
      // Predicated region
      $region9: #{tpu_custom_call.1} parent=5 // pred_check
        _
      $region10: #{tpu_custom_call.1} parent=5 // pred_check_branch
        %168 = sbr.rel (%p165) target = $region12
      $region11: #{tpu_custom_call.1} parent=5 // pred_region
        %s169 = ssub.s32 %s13, 1
        // Predicated region
        $region13: #{tpu_custom_call.1} parent=11 // pred_check
          %p170 = pneg %p106
        $region14: #{tpu_custom_call.1} parent=11 // pred_check_branch
          %172 = sbr.rel (%p170) target = $region16
        $region15: #{tpu_custom_call.1} parent=11 // pred_region
          _
        $region16: #{tpu_custom_call.1} parent=11 // pred_fallthru
          _
        // Predicated region
        $region17: #{tpu_custom_call.1} parent=11 // pred_check
          %p173 = pneg %p127
        $region18: #{tpu_custom_call.1} parent=11 // pred_check_branch
          %175 = sbr.rel (%p173) target = $region20
        $region19: #{tpu_custom_call.1} parent=11 // pred_region
          _
        $region20: #{tpu_custom_call.1} parent=11 // pred_fallthru
          _
      $region12: #{tpu_custom_call.1} parent=5 // pred_fallthru
        _
      %p176 = scmp.lt.s32.totalorder %s13, 2
      // Predicated region
      $region21: #{tpu_custom_call.1} parent=5 // pred_check
        %p177 = pneg %p176
      $region22: #{tpu_custom_call.1} parent=5 // pred_check_branch
        %179 = sbr.rel (%p177) target = $region24
      $region23: #{tpu_custom_call.1} parent=5 // pred_region
        // Predicated region
        $region25: #{tpu_custom_call.1} parent=23 // pred_check
          %p180 = pneg %p47
        $region26: #{tpu_custom_call.1} parent=23 // pred_check_branch
          %182 = sbr.rel (%p180) target = $region28
        $region27: #{tpu_custom_call.1} parent=23 // pred_region
          %s183 = smul.u32 8, %s21
          %s184 = ssub.s32 9, %s183
          %p185 = scmp.lt.s32.totalorder %s184, 8
          %s186 = scalar_select %p185, %s184, 8
          %s187 = smul.u32 64, %s186
          %s188 = smul.u32 %s187, 2
          %s189 = smul.u32 %s188, 2
          %p190 = scmp.lt.s32.totalorder %s20, 1
          %s191 = scalar_select %p190, %s20, 1
          %p192 = scmp.lt.s32.totalorder %s183, 8
          %s193 = scalar_select %p192, %s183, 8
          %s194 = smul.addr %s193, 4
          %s195 = smul.addr %s191, 36
          %s196 = sadd.s32 %s194, %s195
          %s197 = smul.addr %s196, 4
          %s198 = scalar_lea.vmem %s0, %s197
          %s199 = smul.u32 8, %s21
          %s200 = ssub.s32 9, %s199
          %p201 = scmp.lt.s32.totalorder %s200, 8
          %s202 = scalar_select %p201, %s200, 8
          %s203 = smul.u32 64, %s202
          %s204 = smul.u32 %s203, 2
          %s205 = smul.u32 %s204, 2
        $region28: #{tpu_custom_call.1} parent=23 // pred_fallthru
          _
        // Predicated region
        $region29: #{tpu_custom_call.1} parent=23 // pred_check
          %p206 = pneg %p79
        $region30: #{tpu_custom_call.1} parent=23 // pred_check_branch
          %208 = sbr.rel (%p206) target = $region32
        $region31: #{tpu_custom_call.1} parent=23 // pred_region
          %s209 = sadd.s32 %s21, 1
          %s210 = smul.u32 %s209, 8
          %p211 = scmp.lt.s32.totalorder %s20, 1
          %s212 = scalar_select %p211, %s20, 1
          %p213 = scmp.lt.s32.totalorder %s210, 8
          %s214 = scalar_select %p213, %s210, 8
          %s215 = smul.addr %s214, 4
          %s216 = smul.addr %s212, 36
          %s217 = sadd.s32 %s215, %s216
          %s218 = smul.addr %s217, 4
          %s219 = scalar_lea.vmem %s1, %s218
          %s220 = sadd.s32 %s21, 1
          %s221 = smul.u32 %s220, 8
        $region32: #{tpu_custom_call.1} parent=23 // pred_fallthru
          _
      $region24: #{tpu_custom_call.1} parent=5 // pred_fallthru
        _
      %p222 = scmp.le.s32.totalorder 1, %s13
      %p223 = scmp.lt.s32.totalorder %s13, 3
      %p224 = pnand %p222, %p223
      %p225 = pneg %p224
      // Predicated region
      $region33: #{tpu_custom_call.1} parent=5 // pred_check
        _
      $region34: #{tpu_custom_call.1} parent=5 // pred_check_branch
        %227 = sbr.rel (%p224) target = $region36
      $region35: #{tpu_custom_call.1} parent=5 // pred_region
        %s228 = ssub.s32 %s13, 1
        %s229 = smul.u32 8, %s23
        %s230 = ssub.s32 9, %s229
        %p231 = scmp.lt.s32.totalorder %s230, 8
        %s232 = scalar_select %p231, %s230, 8
        %s233 = smul.u32 64, %s232
        %s234 = smul.u32 %s233, 2
        %s235 = smul.u32 %s234, 2
        %p236 = scmp.lt.s32.totalorder %s22, 1
        %s237 = scalar_select %p236, %s22, 1
        %p238 = scmp.lt.s32.totalorder %s229, 8
        %s239 = scalar_select %p238, %s229, 8
        %s240 = smul.addr %s239, 4
        %s241 = smul.addr %s237, 36
        %s242 = sadd.s32 %s240, %s241
        %s243 = smul.addr %s242, 4
        %s244 = scalar_lea.vmem %s0, %s243
        %p245 = pneg %p53
        %p246 = pneg %p50
        %s247 = sadd.s32 %s23, 1
        %s248 = smul.u32 %s247, 8
        %p249 = scmp.lt.s32.totalorder %s22, 1
        %s250 = scalar_select %p249, %s22, 1
        %p251 = scmp.lt.s32.totalorder %s248, 8
        %s252 = scalar_select %p251, %s248, 8
        %s253 = smul.addr %s252, 4
        %s254 = smul.addr %s250, 36
        %s255 = sadd.s32 %s253, %s254
        %s256 = smul.addr %s255, 4
        %s257 = scalar_lea.vmem %s1, %s256
        %p258 = pneg %p85
        %p259 = pneg %p82
        %p260 = pneg %p106
        %p261 = pneg %p103
        %p262 = pneg %p127
        %p263 = pneg %p124
        %p264 = pneg %p155
        %p265 = pneg %p152
        %s266 = sand.u32 %s142, 1
        %s267 = scalar_lea.sflag [#allocation3], %s266
        %s268 = sand.u32 %s142, 1
        %s269 = smul.addr %s268, 64
        %s270 = scalar_lea.vmem [#allocation2], %s269
        %s271 = smul.u32 8, %s23
        %s272 = ssub.s32 9, %s271
        %p273 = scmp.lt.s32.totalorder %s272, 8
        %s274 = scalar_select %p273, %s272, 8
        %s275 = smul.u32 64, %s274
        %s276 = smul.u32 %s275, 2
        %s277 = smul.u32 %s276, 2
        %p278 = scmp.lt.s32.totalorder %s22, 1
        %s279 = scalar_select %p278, %s22, 1
        %p280 = scmp.lt.s32.totalorder %s271, 8
        %s281 = scalar_select %p280, %s271, 8
        %s282 = smul.addr %s281, 4
        %s283 = smul.addr %s279, 36
        %s284 = sadd.s32 %s282, %s283
        %s285 = smul.addr %s284, 4
        %s286 = scalar_lea.vmem %s0, %s285
        %s287 = smul.u32 8, %s23
        %s288 = ssub.s32 9, %s287
        %p289 = scmp.lt.s32.totalorder %s288, 8
        %s290 = scalar_select %p289, %s288, 8
        %s291 = smul.u32 64, %s290
        %s292 = smul.u32 %s291, 2
        %s293 = smul.u32 %s292, 2
        %s294 = sadd.s32 %s23, 1
        %s295 = smul.u32 %s294, 8
        %p296 = scmp.lt.s32.totalorder %s22, 1
        %s297 = scalar_select %p296, %s22, 1
        %p298 = scmp.lt.s32.totalorder %s295, 8
        %s299 = scalar_select %p298, %s295, 8
        %s300 = smul.addr %s299, 4
        %s301 = smul.addr %s297, 36
        %s302 = sadd.s32 %s300, %s301
        %s303 = smul.addr %s302, 4
        %s304 = scalar_lea.vmem %s1, %s303
        %s305 = sadd.s32 %s23, 1
        %s306 = smul.u32 %s305, 8
        %s307 = smul.u32 8, %s23
        %v309 = vld [vmem:[%s286] sm:$0xf]
        %v310 = vld [vmem:[%s286 + $0x4] sm:$0x1]
        %v311 = vld [vmem:[%s286 + $0x8] sm:$0xf]
        %v312 = vld [vmem:[%s286 + $0xc] sm:$0x1]
        %v313 = vld [vmem:[%s286 + $0x10] sm:$0xf]
        %v314 = vld [vmem:[%s286 + $0x14] sm:$0x1]
        %v315 = vld [vmem:[%s286 + $0x18] sm:$0xf]
        %v316 = vld [vmem:[%s286 + $0x1c] sm:$0x1]
        %v317 = vld [vmem:[%s286 + $0x20] sm:$0xf]
        %v318 = vld [vmem:[%s286 + $0x24] sm:$0x1]
        %v319 = vld [vmem:[%s286 + $0x28] sm:$0xf]
        %v320 = vld [vmem:[%s286 + $0x2c] sm:$0x1]
        %v321 = vld [vmem:[%s286 + $0x30] sm:$0xf]
        %v322 = vld [vmem:[%s286 + $0x34] sm:$0x1]
        %v323 = vld [vmem:[%s286 + $0x38] sm:$0xf]
        %v324 = vld [vmem:[%s286 + $0x3c] sm:$0x1]
        %v325 = vld [vmem:[%s286 + $0x40] sm:$0xf]
        %v326 = vld [vmem:[%s286 + $0x44] sm:$0x1]
        %v327 = vld [vmem:[%s286 + $0x48] sm:$0xf]
        %v328 = vld [vmem:[%s286 + $0x4c] sm:$0x1]
        %v329 = vld [vmem:[%s286 + $0x50] sm:$0xf]
        %v330 = vld [vmem:[%s286 + $0x54] sm:$0x1]
        %v331 = vld [vmem:[%s286 + $0x58] sm:$0xf]
        %v332 = vld [vmem:[%s286 + $0x5c] sm:$0x1]
        %v333 = vld [vmem:[%s286 + $0x60] sm:$0xf]
        %v334 = vld [vmem:[%s286 + $0x64] sm:$0x1]
        %v335 = vld [vmem:[%s286 + $0x68] sm:$0xf]
        %v336 = vld [vmem:[%s286 + $0x6c] sm:$0x1]
        %v337 = vld [vmem:[%s286 + $0x70] sm:$0xf]
        %v338 = vld [vmem:[%s286 + $0x74] sm:$0x1]
        %v339 = vld [vmem:[%s286 + $0x78] sm:$0xf]
        %v340 = vld [vmem:[%s286 + $0x7c] sm:$0x1]
        %v341 = vld [vmem:[%s304] sm:$0xf]
        %v342 = vld [vmem:[%s304 + $0x4] sm:$0x1]
        %v343 = vld [vmem:[%s3] sm:$0x1]
        %v345 = vlaneseq
        %v346 = vshrl.u32 %v345, 7
        %v347 = vsub.s32 0, %v346
        %v348 = vrot.slane %v343, %v347
        %v350 = vld [vmem:[%s2] sm:$0xf]
        %v351 = vld [vmem:[%s2 + $0x4] sm:$0xf]
        %v352 = vld [vmem:[%s2 + $0x8] sm:$0xf]
        %v353 = vld [vmem:[%s2 + $0xc] sm:$0xf]
        %v354 = vld [vmem:[%s2 + $0x10] sm:$0xf]
        %v355 = vld [vmem:[%s2 + $0x14] sm:$0xf]
        %v356 = vld [vmem:[%s2 + $0x18] sm:$0xf]
        %v357 = vld [vmem:[%s2 + $0x1c] sm:$0xf]
        %v366 = vunpack.c.l.b16 %v309
        %v367 = vunpack.c.l.b16 %v313
        %v368 = vunpack.c.l.b16 %v317
        %v369 = vunpack.c.l.b16 %v321
        %v370 = vunpack.c.l.b16 %v325
        %v371 = vunpack.c.l.b16 %v329
        %v372 = vunpack.c.l.b16 %v333
        %v373 = vunpack.c.l.b16 %v337
        %v374 = vpack.c.b16 %v367, %v366
        %v375 = vpack.c.b16 %v369, %v368
        %v376 = vpack.c.b16 %v371, %v370
        %v377 = vpack.c.b16 %v373, %v372
        %v386 = vunpack.c.l.b16 %v350
        %v387 = vunpack.c.l.b16 %v351
        %v388 = vunpack.c.l.b16 %v352
        %v389 = vunpack.c.l.b16 %v353
        %v390 = vunpack.c.l.b16 %v354
        %v391 = vunpack.c.l.b16 %v355
        %v392 = vunpack.c.l.b16 %v356
        %v393 = vunpack.c.l.b16 %v357
        %v394 = vpack.c.b16 %v387, %v386
        %v395 = vpack.c.b16 %v389, %v388
        %v396 = vpack.c.b16 %v391, %v390
        %v397 = vpack.c.b16 %v393, %v392
        %vm402 = vcmask 523264
        %v404 = vsel %vm402, %v374, 0
        %v407 = vsel %vm402, %v375, 0
        %v410 = vsel %vm402, %v376, 0
        %v413 = vsel %vm402, %v377, 0
        %415 = vmatprep.subr.bf16.mxu0 0
        %416 = vmatpush1.bf16.msra.mxu0 0
        %417 = vmatprep.subr.bf16.mxu0 0
        %418 = vmatpush1.bf16.msra.mxu0 0
        %419 = vmatprep.subr.bf16.mxu0 0
        %420 = vmatpush1.bf16.msra.mxu0 0
        %421 = vmatprep.subr.bf16.mxu0 0
        %422 = vmatpush1.bf16.msra.mxu0 0
        %423 = vmatprep.subr.bf16.mxu0 0
        %424 = vmatpush1.bf16.msra.mxu0 %v397
        %425 = vmatprep.subr.bf16.mxu0 0
        %426 = vmatpush1.bf16.msra.mxu0 %v396
        %427 = vmatprep.subr.bf16.mxu0 0
        %428 = vmatpush1.bf16.msra.mxu0 %v395
        %429 = vmatprep.subr.bf16.mxu0 0
        %430 = vmatpush1.bf16.msra.mxu0 %v394
        %431 = vmatprep.subr.bf16.mxu0 0
        %432 = vmatpush2.bf16.msra.mxu0 0
        %433 = vmatprep.subr.bf16.mxu0 0
        %434 = vmatpush2.bf16.msra.mxu0 0
        %435 = vmatprep.subr.bf16.mxu0 0
        %436 = vmatpush2.bf16.msra.mxu0 0
        %437 = vmatprep.subr.bf16.mxu0 0
        %438 = vmatpush2.bf16.msra.mxu0 0
        %439 = vmatprep.subr.bf16.mxu0 0
        %440 = vmatpush2.bf16.msra.mxu0 0
        %441 = vmatprep.subr.bf16.mxu0 0
        %442 = vmatpush2.bf16.msra.mxu0 0
        %443 = vmatprep.subr.bf16.mxu0 0
        %444 = vmatpush2.bf16.msra.mxu0 0
        %445 = vmatprep.subr.bf16.mxu0 0
        %446 = vmatpush2.bf16.msra.mxu0 0
        %447 = vmatprep.mubr.bf16.mxu0 0
        %448 = vmatmul.mubr.bf16.gmra.mxu0 %v404
        %v449 = vpop.f32.mrf.mxu0
        %v450 = vadd.f32 0.0, %v449
        %v451 = vpop.f32.mrf.mxu0
        %v452 = vpop.f32.mrf.mxu0
        %v453 = vadd.f32 0.0, %v452
        %v454 = vpop.f32.mrf.mxu0
        %455 = vmatprep.mubr.bf16.mxu0 0
        %456 = vmatmul.mubr.bf16.gmra.mxu0 %v407
        %v457 = vpop.f32.mrf.mxu0
        %v458 = vadd.f32 0.0, %v457
        %v459 = vpop.f32.mrf.mxu0
        %v460 = vpop.f32.mrf.mxu0
        %v461 = vadd.f32 0.0, %v460
        %v462 = vpop.f32.mrf.mxu0
        %463 = vmatprep.mubr.bf16.mxu0 0
        %464 = vmatmul.mubr.bf16.gmra.mxu0 %v410
        %v465 = vpop.f32.mrf.mxu0
        %v466 = vadd.f32 0.0, %v465
        %v467 = vpop.f32.mrf.mxu0
        %v468 = vpop.f32.mrf.mxu0
        %v469 = vadd.f32 0.0, %v468
        %v470 = vpop.f32.mrf.mxu0
        %471 = vmatprep.mubr.bf16.mxu0 0
        %472 = vmatmul.mubr.bf16.gmra.mxu0 %v413
        %v473 = vpop.f32.mrf.mxu0
        %v474 = vadd.f32 0.0, %v473
        %v475 = vpop.f32.mrf.mxu0
        %v476 = vpop.f32.mrf.mxu0
        %v477 = vadd.f32 0.0, %v476
        %v478 = vpop.f32.mrf.mxu0
        %479 = vdwg.mxu0
        %v480 = vadd.f32 %v348, %v450
        %v481 = vadd.f32 %v348, %v453
        %v482 = vadd.f32 %v348, %v458
        %v483 = vadd.f32 %v348, %v461
        %v484 = vadd.f32 %v348, %v466
        %v485 = vadd.f32 %v348, %v469
        %v486 = vadd.f32 %v348, %v474
        %v487 = vadd.f32 %v348, %v477
        %s488 = scalar_lea.vmem %s2, 32
        %v489 = vld [vmem:[%s488] sm:$0xf]
        %v490 = vld [vmem:[%s488 + $0x4] sm:$0xf]
        %v491 = vld [vmem:[%s488 + $0x8] sm:$0xf]
        %v492 = vld [vmem:[%s488 + $0xc] sm:$0xf]
        %v493 = vld [vmem:[%s488 + $0x10] sm:$0xf]
        %v494 = vld [vmem:[%s488 + $0x14] sm:$0xf]
        %v495 = vld [vmem:[%s488 + $0x18] sm:$0xf]
        %v496 = vld [vmem:[%s488 + $0x1c] sm:$0xf]
        %497 = vrot.lane.b32.xlu0 %v374, 64
        %v498 = vpop.permute.xlu0 %497
        %499 = vrot.lane.b32.xlu0 %v375, 64
        %v500 = vpop.permute.xlu0 %499
        %501 = vrot.lane.b32.xlu0 %v376, 64
        %v502 = vpop.permute.xlu0 %501
        %503 = vrot.lane.b32.xlu0 %v377, 64
        %v504 = vpop.permute.xlu0 %503
        %v513 = vunpack.c.l.b16 %v489
        %v514 = vunpack.c.l.b16 %v490
        %v515 = vunpack.c.l.b16 %v491
        %v516 = vunpack.c.l.b16 %v492
        %v517 = vunpack.c.l.b16 %v493
        %v518 = vunpack.c.l.b16 %v494
        %v519 = vunpack.c.l.b16 %v495
        %v520 = vunpack.c.l.b16 %v496
        %v521 = vpack.c.b16 %v514, %v513
        %v522 = vpack.c.b16 %v516, %v515
        %v523 = vpack.c.b16 %v518, %v517
        %v524 = vpack.c.b16 %v520, %v519
        %v530 = vsel %vm402, %v498, 0
        %v533 = vsel %vm402, %v500, 0
        %v536 = vsel %vm402, %v502, 0
        %v539 = vsel %vm402, %v504, 0
        %541 = vmatprep.subr.bf16.mxu0 0
        %542 = vmatpush1.bf16.msra.mxu0 0
        %543 = vmatprep.subr.bf16.mxu0 0
        %544 = vmatpush1.bf16.msra.mxu0 0
        %545 = vmatprep.subr.bf16.mxu0 0
        %546 = vmatpush1.bf16.msra.mxu0 0
        %547 = vmatprep.subr.bf16.mxu0 0
        %548 = vmatpush1.bf16.msra.mxu0 0
        %549 = vmatprep.subr.bf16.mxu0 0
        %550 = vmatpush1.bf16.msra.mxu0 %v524
        %551 = vmatprep.subr.bf16.mxu0 0
        %552 = vmatpush1.bf16.msra.mxu0 %v523
        %553 = vmatprep.subr.bf16.mxu0 0
        %554 = vmatpush1.bf16.msra.mxu0 %v522
        %555 = vmatprep.subr.bf16.mxu0 0
        %556 = vmatpush1.bf16.msra.mxu0 %v521
        %557 = vmatprep.subr.bf16.mxu0 0
        %558 = vmatpush2.bf16.msra.mxu0 0
        %559 = vmatprep.subr.bf16.mxu0 0
        %560 = vmatpush2.bf16.msra.mxu0 0
        %561 = vmatprep.subr.bf16.mxu0 0
        %562 = vmatpush2.bf16.msra.mxu0 0
        %563 = vmatprep.subr.bf16.mxu0 0
        %564 = vmatpush2.bf16.msra.mxu0 0
        %565 = vmatprep.subr.bf16.mxu0 0
        %566 = vmatpush2.bf16.msra.mxu0 0
        %567 = vmatprep.subr.bf16.mxu0 0
        %568 = vmatpush2.bf16.msra.mxu0 0
        %569 = vmatprep.subr.bf16.mxu0 0
        %570 = vmatpush2.bf16.msra.mxu0 0
        %571 = vmatprep.subr.bf16.mxu0 0
        %572 = vmatpush2.bf16.msra.mxu0 0
        %573 = vmatprep.mubr.bf16.mxu0 0
        %574 = vmatmul.mubr.bf16.gmra.mxu0 %v530
        %v575 = vpop.f32.mrf.mxu0
        %v576 = vadd.f32 0.0, %v575
        %v577 = vpop.f32.mrf.mxu0
        %v578 = vpop.f32.mrf.mxu0
        %v579 = vadd.f32 0.0, %v578
        %v580 = vpop.f32.mrf.mxu0
        %581 = vmatprep.mubr.bf16.mxu0 0
        %582 = vmatmul.mubr.bf16.gmra.mxu0 %v533
        %v583 = vpop.f32.mrf.mxu0
        %v584 = vadd.f32 0.0, %v583
        %v585 = vpop.f32.mrf.mxu0
        %v586 = vpop.f32.mrf.mxu0
        %v587 = vadd.f32 0.0, %v586
        %v588 = vpop.f32.mrf.mxu0
        %589 = vmatprep.mubr.bf16.mxu0 0
        %590 = vmatmul.mubr.bf16.gmra.mxu0 %v536
        %v591 = vpop.f32.mrf.mxu0
        %v592 = vadd.f32 0.0, %v591
        %v593 = vpop.f32.mrf.mxu0
        %v594 = vpop.f32.mrf.mxu0
        %v595 = vadd.f32 0.0, %v594
        %v596 = vpop.f32.mrf.mxu0
        %597 = vmatprep.mubr.bf16.mxu0 0
        %598 = vmatmul.mubr.bf16.gmra.mxu0 %v539
        %v599 = vpop.f32.mrf.mxu0
        %v600 = vadd.f32 0.0, %v599
        %v601 = vpop.f32.mrf.mxu0
        %v602 = vpop.f32.mrf.mxu0
        %v603 = vadd.f32 0.0, %v602
        %v604 = vpop.f32.mrf.mxu0
        %605 = vdwg.mxu0
        %v606 = vadd.f32 %v480, %v576
        %v607 = vadd.f32 %v481, %v579
        %v608 = vadd.f32 %v482, %v584
        %v609 = vadd.f32 %v483, %v587
        %v610 = vadd.f32 %v484, %v592
        %v611 = vadd.f32 %v485, %v595
        %v612 = vadd.f32 %v486, %v600
        %v613 = vadd.f32 %v487, %v603
        %vm614 = vsmask.f32 3328
        %vm615 = vsmask.f32 7440
        %vm616 = vmor %vm614, %vm615
        %v618 = vshrl.u32 %v309, 16
        %v620 = vrot.slane %v618, 4
        %v621 = vshll.u32 %v309, 16
        %v623 = vrot.slane %v621, 5
        %v624 = vor.u32 %v620, %v623
        %v625 = vrot.slane %v624, 4
        %v627 = vshll.u32 %v310, 16
        %v629 = vrot.slane %v627, 5
        %v630 = vsel %vm616, %v625, %v629
        %v632 = vshrl.u32 %v313, 16
        %v634 = vrot.slane %v632, 4
        %v635 = vshll.u32 %v313, 16
        %v637 = vrot.slane %v635, 5
        %v638 = vor.u32 %v634, %v637
        %v639 = vrot.slane %v638, 4
        %v641 = vshll.u32 %v314, 16
        %v643 = vrot.slane %v641, 5
        %v644 = vsel %vm616, %v639, %v643
        %v646 = vshrl.u32 %v317, 16
        %v648 = vrot.slane %v646, 4
        %v649 = vshll.u32 %v317, 16
        %v651 = vrot.slane %v649, 5
        %v652 = vor.u32 %v648, %v651
        %v653 = vrot.slane %v652, 4
        %v655 = vshll.u32 %v318, 16
        %v657 = vrot.slane %v655, 5
        %v658 = vsel %vm616, %v653, %v657
        %v660 = vshrl.u32 %v321, 16
        %v662 = vrot.slane %v660, 4
        %v663 = vshll.u32 %v321, 16
        %v665 = vrot.slane %v663, 5
        %v666 = vor.u32 %v662, %v665
        %v667 = vrot.slane %v666, 4
        %v669 = vshll.u32 %v322, 16
        %v671 = vrot.slane %v669, 5
        %v672 = vsel %vm616, %v667, %v671
        %v674 = vshrl.u32 %v325, 16
        %v676 = vrot.slane %v674, 4
        %v677 = vshll.u32 %v325, 16
        %v679 = vrot.slane %v677, 5
        %v680 = vor.u32 %v676, %v679
        %v681 = vrot.slane %v680, 4
        %v683 = vshll.u32 %v326, 16
        %v685 = vrot.slane %v683, 5
        %v686 = vsel %vm616, %v681, %v685
        %v688 = vshrl.u32 %v329, 16
        %v690 = vrot.slane %v688, 4
        %v691 = vshll.u32 %v329, 16
        %v693 = vrot.slane %v691, 5
        %v694 = vor.u32 %v690, %v693
        %v695 = vrot.slane %v694, 4
        %v697 = vshll.u32 %v330, 16
        %v699 = vrot.slane %v697, 5
        %v700 = vsel %vm616, %v695, %v699
        %v702 = vshrl.u32 %v333, 16
        %v704 = vrot.slane %v702, 4
        %v705 = vshll.u32 %v333, 16
        %v707 = vrot.slane %v705, 5
        %v708 = vor.u32 %v704, %v707
        %v709 = vrot.slane %v708, 4
        %v711 = vshll.u32 %v334, 16
        %v713 = vrot.slane %v711, 5
        %v714 = vsel %vm616, %v709, %v713
        %v716 = vshrl.u32 %v337, 16
        %v718 = vrot.slane %v716, 4
        %v719 = vshll.u32 %v337, 16
        %v721 = vrot.slane %v719, 5
        %v722 = vor.u32 %v718, %v721
        %v723 = vrot.slane %v722, 4
        %v725 = vshll.u32 %v338, 16
        %v727 = vrot.slane %v725, 5
        %v728 = vsel %vm616, %v723, %v727
        %s729 = scalar_lea.vmem %s2, 64
        %v730 = vld [vmem:[%s729] sm:$0xf]
        %v731 = vld [vmem:[%s729 + $0x4] sm:$0xf]
        %v732 = vld [vmem:[%s729 + $0x8] sm:$0xf]
        %v733 = vld [vmem:[%s729 + $0xc] sm:$0xf]
        %v734 = vld [vmem:[%s729 + $0x10] sm:$0xf]
        %v735 = vld [vmem:[%s729 + $0x14] sm:$0xf]
        %v736 = vld [vmem:[%s729 + $0x18] sm:$0xf]
        %v737 = vld [vmem:[%s729 + $0x1c] sm:$0xf]
        %v738 = vunpack.c.l.b16 %v630
        %v739 = vunpack.c.l.b16 %v644
        %v740 = vunpack.c.l.b16 %v658
        %v741 = vunpack.c.l.b16 %v672
        %v742 = vunpack.c.l.b16 %v686
        %v743 = vunpack.c.l.b16 %v700
        %v744 = vunpack.c.l.b16 %v714
        %v745 = vunpack.c.l.b16 %v728
        %v746 = vpack.c.b16 %v739, %v738
        %v747 = vpack.c.b16 %v741, %v740
        %v748 = vpack.c.b16 %v743, %v742
        %v749 = vpack.c.b16 %v745, %v744
        %v758 = vunpack.c.l.b16 %v730
        %v759 = vunpack.c.l.b16 %v731
        %v760 = vunpack.c.l.b16 %v732
        %v761 = vunpack.c.l.b16 %v733
        %v762 = vunpack.c.l.b16 %v734
        %v763 = vunpack.c.l.b16 %v735
        %v764 = vunpack.c.l.b16 %v736
        %v765 = vunpack.c.l.b16 %v737
        %v766 = vpack.c.b16 %v759, %v758
        %v767 = vpack.c.b16 %v761, %v760
        %v768 = vpack.c.b16 %v763, %v762
        %v769 = vpack.c.b16 %v765, %v764
        %v775 = vsel %vm402, %v746, 0
        %v778 = vsel %vm402, %v747, 0
        %v781 = vsel %vm402, %v748, 0
        %v784 = vsel %vm402, %v749, 0
        %786 = vmatprep.subr.bf16.mxu0 0
        %787 = vmatpush1.bf16.msra.mxu0 0
        %788 = vmatprep.subr.bf16.mxu0 0
        %789 = vmatpush1.bf16.msra.mxu0 0
        %790 = vmatprep.subr.bf16.mxu0 0
        %791 = vmatpush1.bf16.msra.mxu0 0
        %792 = vmatprep.subr.bf16.mxu0 0
        %793 = vmatpush1.bf16.msra.mxu0 0
        %794 = vmatprep.subr.bf16.mxu0 0
        %795 = vmatpush1.bf16.msra.mxu0 %v769
        %796 = vmatprep.subr.bf16.mxu0 0
        %797 = vmatpush1.bf16.msra.mxu0 %v768
        %798 = vmatprep.subr.bf16.mxu0 0
        %799 = vmatpush1.bf16.msra.mxu0 %v767
        %800 = vmatprep.subr.bf16.mxu0 0
        %801 = vmatpush1.bf16.msra.mxu0 %v766
        %802 = vmatprep.subr.bf16.mxu0 0
        %803 = vmatpush2.bf16.msra.mxu0 0
        %804 = vmatprep.subr.bf16.mxu0 0
        %805 = vmatpush2.bf16.msra.mxu0 0
        %806 = vmatprep.subr.bf16.mxu0 0
        %807 = vmatpush2.bf16.msra.mxu0 0
        %808 = vmatprep.subr.bf16.mxu0 0
        %809 = vmatpush2.bf16.msra.mxu0 0
        %810 = vmatprep.subr.bf16.mxu0 0
        %811 = vmatpush2.bf16.msra.mxu0 0
        %812 = vmatprep.subr.bf16.mxu0 0
        %813 = vmatpush2.bf16.msra.mxu0 0
        %814 = vmatprep.subr.bf16.mxu0 0
        %815 = vmatpush2.bf16.msra.mxu0 0
        %816 = vmatprep.subr.bf16.mxu0 0
        %817 = vmatpush2.bf16.msra.mxu0 0
        %818 = vmatprep.mubr.bf16.mxu0 0
        %819 = vmatmul.mubr.bf16.gmra.mxu0 %v775
        %v820 = vpop.f32.mrf.mxu0
        %v821 = vadd.f32 0.0, %v820
        %v822 = vpop.f32.mrf.mxu0
        %v823 = vpop.f32.mrf.mxu0
        %v824 = vadd.f32 0.0, %v823
        %v825 = vpop.f32.mrf.mxu0
        %826 = vmatprep.mubr.bf16.mxu0 0
        %827 = vmatmul.mubr.bf16.gmra.mxu0 %v778
        %v828 = vpop.f32.mrf.mxu0
        %v829 = vadd.f32 0.0, %v828
        %v830 = vpop.f32.mrf.mxu0
        %v831 = vpop.f32.mrf.mxu0
        %v832 = vadd.f32 0.0, %v831
        %v833 = vpop.f32.mrf.mxu0
        %834 = vmatprep.mubr.bf16.mxu0 0
        %835 = vmatmul.mubr.bf16.gmra.mxu0 %v781
        %v836 = vpop.f32.mrf.mxu0
        %v837 = vadd.f32 0.0, %v836
        %v838 = vpop.f32.mrf.mxu0
        %v839 = vpop.f32.mrf.mxu0
        %v840 = vadd.f32 0.0, %v839
        %v841 = vpop.f32.mrf.mxu0
        %842 = vmatprep.mubr.bf16.mxu0 0
        %843 = vmatmul.mubr.bf16.gmra.mxu0 %v784
        %v844 = vpop.f32.mrf.mxu0
        %v845 = vadd.f32 0.0, %v844
        %v846 = vpop.f32.mrf.mxu0
        %v847 = vpop.f32.mrf.mxu0
        %v848 = vadd.f32 0.0, %v847
        %v849 = vpop.f32.mrf.mxu0
        %850 = vdwg.mxu0
        %v851 = vadd.f32 %v606, %v821
        %v852 = vadd.f32 %v607, %v824
        %v853 = vadd.f32 %v608, %v829
        %v854 = vadd.f32 %v609, %v832
        %v855 = vadd.f32 %v610, %v837
        %v856 = vadd.f32 %v611, %v840
        %v857 = vadd.f32 %v612, %v845
        %v858 = vadd.f32 %v613, %v848
        %s859 = scalar_lea.vmem %s2, 96
        %v860 = vld [vmem:[%s859] sm:$0xf]
        %v861 = vld [vmem:[%s859 + $0x4] sm:$0xf]
        %v862 = vld [vmem:[%s859 + $0x8] sm:$0xf]
        %v863 = vld [vmem:[%s859 + $0xc] sm:$0xf]
        %v864 = vld [vmem:[%s859 + $0x10] sm:$0xf]
        %v865 = vld [vmem:[%s859 + $0x14] sm:$0xf]
        %v866 = vld [vmem:[%s859 + $0x18] sm:$0xf]
        %v867 = vld [vmem:[%s859 + $0x1c] sm:$0xf]
        %v876 = vunpack.c.l.b16 %v311
        %v877 = vunpack.c.l.b16 %v315
        %v878 = vunpack.c.l.b16 %v319
        %v879 = vunpack.c.l.b16 %v323
        %v880 = vunpack.c.l.b16 %v327
        %v881 = vunpack.c.l.b16 %v331
        %v882 = vunpack.c.l.b16 %v335
        %v883 = vunpack.c.l.b16 %v339
        %v884 = vpack.c.b16 %v877, %v876
        %v885 = vpack.c.b16 %v879, %v878
        %v886 = vpack.c.b16 %v881, %v880
        %v887 = vpack.c.b16 %v883, %v882
        %v896 = vunpack.c.l.b16 %v860
        %v897 = vunpack.c.l.b16 %v861
        %v898 = vunpack.c.l.b16 %v862
        %v899 = vunpack.c.l.b16 %v863
        %v900 = vunpack.c.l.b16 %v864
        %v901 = vunpack.c.l.b16 %v865
        %v902 = vunpack.c.l.b16 %v866
        %v903 = vunpack.c.l.b16 %v867
        %v904 = vpack.c.b16 %v897, %v896
        %v905 = vpack.c.b16 %v899, %v898
        %v906 = vpack.c.b16 %v901, %v900
        %v907 = vpack.c.b16 %v903, %v902
        %v913 = vsel %vm402, %v884, 0
        %v916 = vsel %vm402, %v885, 0
        %v919 = vsel %vm402, %v886, 0
        %v922 = vsel %vm402, %v887, 0
        %924 = vmatprep.subr.bf16.mxu0 0
        %925 = vmatpush1.bf16.msra.mxu0 0
        %926 = vmatprep.subr.bf16.mxu0 0
        %927 = vmatpush1.bf16.msra.mxu0 0
        %928 = vmatprep.subr.bf16.mxu0 0
        %929 = vmatpush1.bf16.msra.mxu0 0
        %930 = vmatprep.subr.bf16.mxu0 0
        %931 = vmatpush1.bf16.msra.mxu0 0
        %932 = vmatprep.subr.bf16.mxu0 0
        %933 = vmatpush1.bf16.msra.mxu0 %v907
        %934 = vmatprep.subr.bf16.mxu0 0
        %935 = vmatpush1.bf16.msra.mxu0 %v906
        %936 = vmatprep.subr.bf16.mxu0 0
        %937 = vmatpush1.bf16.msra.mxu0 %v905
        %938 = vmatprep.subr.bf16.mxu0 0
        %939 = vmatpush1.bf16.msra.mxu0 %v904
        %940 = vmatprep.subr.bf16.mxu0 0
        %941 = vmatpush2.bf16.msra.mxu0 0
        %942 = vmatprep.subr.bf16.mxu0 0
        %943 = vmatpush2.bf16.msra.mxu0 0
        %944 = vmatprep.subr.bf16.mxu0 0
        %945 = vmatpush2.bf16.msra.mxu0 0
        %946 = vmatprep.subr.bf16.mxu0 0
        %947 = vmatpush2.bf16.msra.mxu0 0
        %948 = vmatprep.subr.bf16.mxu0 0
        %949 = vmatpush2.bf16.msra.mxu0 0
        %950 = vmatprep.subr.bf16.mxu0 0
        %951 = vmatpush2.bf16.msra.mxu0 0
        %952 = vmatprep.subr.bf16.mxu0 0
        %953 = vmatpush2.bf16.msra.mxu0 0
        %954 = vmatprep.subr.bf16.mxu0 0
        %955 = vmatpush2.bf16.msra.mxu0 0
        %956 = vmatprep.mubr.bf16.mxu0 0
        %957 = vmatmul.mubr.bf16.gmra.mxu0 %v913
        %v958 = vpop.f32.mrf.mxu0
        %v959 = vadd.f32 0.0, %v958
        %v960 = vpop.f32.mrf.mxu0
        %v961 = vpop.f32.mrf.mxu0
        %v962 = vadd.f32 0.0, %v961
        %v963 = vpop.f32.mrf.mxu0
        %964 = vmatprep.mubr.bf16.mxu0 0
        %965 = vmatmul.mubr.bf16.gmra.mxu0 %v916
        %v966 = vpop.f32.mrf.mxu0
        %v967 = vadd.f32 0.0, %v966
        %v968 = vpop.f32.mrf.mxu0
        %v969 = vpop.f32.mrf.mxu0
        %v970 = vadd.f32 0.0, %v969
        %v971 = vpop.f32.mrf.mxu0
        %972 = vmatprep.mubr.bf16.mxu0 0
        %973 = vmatmul.mubr.bf16.gmra.mxu0 %v919
        %v974 = vpop.f32.mrf.mxu0
        %v975 = vadd.f32 0.0, %v974
        %v976 = vpop.f32.mrf.mxu0
        %v977 = vpop.f32.mrf.mxu0
        %v978 = vadd.f32 0.0, %v977
        %v979 = vpop.f32.mrf.mxu0
        %980 = vmatprep.mubr.bf16.mxu0 0
        %981 = vmatmul.mubr.bf16.gmra.mxu0 %v922
        %v982 = vpop.f32.mrf.mxu0
        %v983 = vadd.f32 0.0, %v982
        %v984 = vpop.f32.mrf.mxu0
        %v985 = vpop.f32.mrf.mxu0
        %v986 = vadd.f32 0.0, %v985
        %v987 = vpop.f32.mrf.mxu0
        %988 = vdwg.mxu0
        %v989 = vadd.f32 %v851, %v959
        %v990 = vadd.f32 %v852, %v962
        %v991 = vadd.f32 %v853, %v967
        %v992 = vadd.f32 %v854, %v970
        %v993 = vadd.f32 %v855, %v975
        %v994 = vadd.f32 %v856, %v978
        %v995 = vadd.f32 %v857, %v983
        %v996 = vadd.f32 %v858, %v986
        %s997 = scalar_lea.vmem %s2, 128
        %v998 = vld [vmem:[%s997] sm:$0xf]
        %v999 = vld [vmem:[%s997 + $0x4] sm:$0xf]
        %v1000 = vld [vmem:[%s997 + $0x8] sm:$0xf]
        %v1001 = vld [vmem:[%s997 + $0xc] sm:$0xf]
        %v1002 = vld [vmem:[%s997 + $0x10] sm:$0xf]
        %v1003 = vld [vmem:[%s997 + $0x14] sm:$0xf]
        %v1004 = vld [vmem:[%s997 + $0x18] sm:$0xf]
        %v1005 = vld [vmem:[%s997 + $0x1c] sm:$0xf]
        %1006 = vrot.lane.b32.xlu0 %v884, 64
        %v1007 = vpop.permute.xlu0 %1006
        %1008 = vrot.lane.b32.xlu0 %v885, 64
        %v1009 = vpop.permute.xlu0 %1008
        %1010 = vrot.lane.b32.xlu0 %v886, 64
        %v1011 = vpop.permute.xlu0 %1010
        %1012 = vrot.lane.b32.xlu0 %v887, 64
        %v1013 = vpop.permute.xlu0 %1012
        %v1022 = vunpack.c.l.b16 %v998
        %v1023 = vunpack.c.l.b16 %v999
        %v1024 = vunpack.c.l.b16 %v1000
        %v1025 = vunpack.c.l.b16 %v1001
        %v1026 = vunpack.c.l.b16 %v1002
        %v1027 = vunpack.c.l.b16 %v1003
        %v1028 = vunpack.c.l.b16 %v1004
        %v1029 = vunpack.c.l.b16 %v1005
        %v1030 = vpack.c.b16 %v1023, %v1022
        %v1031 = vpack.c.b16 %v1025, %v1024
        %v1032 = vpack.c.b16 %v1027, %v1026
        %v1033 = vpack.c.b16 %v1029, %v1028
        %v1039 = vsel %vm402, %v1007, 0
        %v1042 = vsel %vm402, %v1009, 0
        %v1045 = vsel %vm402, %v1011, 0
        %v1048 = vsel %vm402, %v1013, 0
        %1050 = vmatprep.subr.bf16.mxu0 0
        %1051 = vmatpush1.bf16.msra.mxu0 0
        %1052 = vmatprep.subr.bf16.mxu0 0
        %1053 = vmatpush1.bf16.msra.mxu0 0
        %1054 = vmatprep.subr.bf16.mxu0 0
        %1055 = vmatpush1.bf16.msra.mxu0 0
        %1056 = vmatprep.subr.bf16.mxu0 0
        %1057 = vmatpush1.bf16.msra.mxu0 0
        %1058 = vmatprep.subr.bf16.mxu0 0
        %1059 = vmatpush1.bf16.msra.mxu0 %v1033
        %1060 = vmatprep.subr.bf16.mxu0 0
        %1061 = vmatpush1.bf16.msra.mxu0 %v1032
        %1062 = vmatprep.subr.bf16.mxu0 0
        %1063 = vmatpush1.bf16.msra.mxu0 %v1031
        %1064 = vmatprep.subr.bf16.mxu0 0
        %1065 = vmatpush1.bf16.msra.mxu0 %v1030
        %1066 = vmatprep.subr.bf16.mxu0 0
        %1067 = vmatpush2.bf16.msra.mxu0 0
        %1068 = vmatprep.subr.bf16.mxu0 0
        %1069 = vmatpush2.bf16.msra.mxu0 0
        %1070 = vmatprep.subr.bf16.mxu0 0
        %1071 = vmatpush2.bf16.msra.mxu0 0
        %1072 = vmatprep.subr.bf16.mxu0 0
        %1073 = vmatpush2.bf16.msra.mxu0 0
        %1074 = vmatprep.subr.bf16.mxu0 0
        %1075 = vmatpush2.bf16.msra.mxu0 0
        %1076 = vmatprep.subr.bf16.mxu0 0
        %1077 = vmatpush2.bf16.msra.mxu0 0
        %1078 = vmatprep.subr.bf16.mxu0 0
        %1079 = vmatpush2.bf16.msra.mxu0 0
        %1080 = vmatprep.subr.bf16.mxu0 0
        %1081 = vmatpush2.bf16.msra.mxu0 0
        %1082 = vmatprep.mubr.bf16.mxu0 0
        %1083 = vmatmul.mubr.bf16.gmra.mxu0 %v1039
        %v1084 = vpop.f32.mrf.mxu0
        %v1085 = vadd.f32 0.0, %v1084
        %v1086 = vpop.f32.mrf.mxu0
        %v1087 = vpop.f32.mrf.mxu0
        %v1088 = vadd.f32 0.0, %v1087
        %v1089 = vpop.f32.mrf.mxu0
        %1090 = vmatprep.mubr.bf16.mxu0 0
        %1091 = vmatmul.mubr.bf16.gmra.mxu0 %v1042
        %v1092 = vpop.f32.mrf.mxu0
        %v1093 = vadd.f32 0.0, %v1092
        %v1094 = vpop.f32.mrf.mxu0
        %v1095 = vpop.f32.mrf.mxu0
        %v1096 = vadd.f32 0.0, %v1095
        %v1097 = vpop.f32.mrf.mxu0
        %1098 = vmatprep.mubr.bf16.mxu0 0
        %1099 = vmatmul.mubr.bf16.gmra.mxu0 %v1045
        %v1100 = vpop.f32.mrf.mxu0
        %v1101 = vadd.f32 0.0, %v1100
        %v1102 = vpop.f32.mrf.mxu0
        %v1103 = vpop.f32.mrf.mxu0
        %v1104 = vadd.f32 0.0, %v1103
        %v1105 = vpop.f32.mrf.mxu0
        %1106 = vmatprep.mubr.bf16.mxu0 0
        %1107 = vmatmul.mubr.bf16.gmra.mxu0 %v1048
        %v1108 = vpop.f32.mrf.mxu0
        %v1109 = vadd.f32 0.0, %v1108
        %v1110 = vpop.f32.mrf.mxu0
        %v1111 = vpop.f32.mrf.mxu0
        %v1112 = vadd.f32 0.0, %v1111
        %v1113 = vpop.f32.mrf.mxu0
        %1114 = vdwg.mxu0
        %v1115 = vadd.f32 %v989, %v1085
        %v1116 = vadd.f32 %v990, %v1088
        %v1117 = vadd.f32 %v991, %v1093
        %v1118 = vadd.f32 %v992, %v1096
        %v1119 = vadd.f32 %v993, %v1101
        %v1120 = vadd.f32 %v994, %v1104
        %v1121 = vadd.f32 %v995, %v1109
        %v1122 = vadd.f32 %v996, %v1112
        %v1124 = vshrl.u32 %v311, 16
        %v1126 = vrot.slane %v1124, 4
        %v1127 = vshll.u32 %v311, 16
        %v1129 = vrot.slane %v1127, 5
        %v1130 = vor.u32 %v1126, %v1129
        %v1131 = vrot.slane %v1130, 4
        %v1133 = vshll.u32 %v312, 16
        %v1135 = vrot.slane %v1133, 5
        %v1136 = vsel %vm616, %v1131, %v1135
        %v1138 = vshrl.u32 %v315, 16
        %v1140 = vrot.slane %v1138, 4
        %v1141 = vshll.u32 %v315, 16
        %v1143 = vrot.slane %v1141, 5
        %v1144 = vor.u32 %v1140, %v1143
        %v1145 = vrot.slane %v1144, 4
        %v1147 = vshll.u32 %v316, 16
        %v1149 = vrot.slane %v1147, 5
        %v1150 = vsel %vm616, %v1145, %v1149
        %v1152 = vshrl.u32 %v319, 16
        %v1154 = vrot.slane %v1152, 4
        %v1155 = vshll.u32 %v319, 16
        %v1157 = vrot.slane %v1155, 5
        %v1158 = vor.u32 %v1154, %v1157
        %v1159 = vrot.slane %v1158, 4
        %v1161 = vshll.u32 %v320, 16
        %v1163 = vrot.slane %v1161, 5
        %v1164 = vsel %vm616, %v1159, %v1163
        %v1166 = vshrl.u32 %v323, 16
        %v1168 = vrot.slane %v1166, 4
        %v1169 = vshll.u32 %v323, 16
        %v1171 = vrot.slane %v1169, 5
        %v1172 = vor.u32 %v1168, %v1171
        %v1173 = vrot.slane %v1172, 4
        %v1175 = vshll.u32 %v324, 16
        %v1177 = vrot.slane %v1175, 5
        %v1178 = vsel %vm616, %v1173, %v1177
        %v1180 = vshrl.u32 %v327, 16
        %v1182 = vrot.slane %v1180, 4
        %v1183 = vshll.u32 %v327, 16
        %v1185 = vrot.slane %v1183, 5
        %v1186 = vor.u32 %v1182, %v1185
        %v1187 = vrot.slane %v1186, 4
        %v1189 = vshll.u32 %v328, 16
        %v1191 = vrot.slane %v1189, 5
        %v1192 = vsel %vm616, %v1187, %v1191
        %v1194 = vshrl.u32 %v331, 16
        %v1196 = vrot.slane %v1194, 4
        %v1197 = vshll.u32 %v331, 16
        %v1199 = vrot.slane %v1197, 5
        %v1200 = vor.u32 %v1196, %v1199
        %v1201 = vrot.slane %v1200, 4
        %v1203 = vshll.u32 %v332, 16
        %v1205 = vrot.slane %v1203, 5
        %v1206 = vsel %vm616, %v1201, %v1205
        %v1208 = vshrl.u32 %v335, 16
        %v1210 = vrot.slane %v1208, 4
        %v1211 = vshll.u32 %v335, 16
        %v1213 = vrot.slane %v1211, 5
        %v1214 = vor.u32 %v1210, %v1213
        %v1215 = vrot.slane %v1214, 4
        %v1217 = vshll.u32 %v336, 16
        %v1219 = vrot.slane %v1217, 5
        %v1220 = vsel %vm616, %v1215, %v1219
        %v1222 = vshrl.u32 %v339, 16
        %v1224 = vrot.slane %v1222, 4
        %v1225 = vshll.u32 %v339, 16
        %v1227 = vrot.slane %v1225, 5
        %v1228 = vor.u32 %v1224, %v1227
        %v1229 = vrot.slane %v1228, 4
        %v1231 = vshll.u32 %v340, 16
        %v1233 = vrot.slane %v1231, 5
        %v1234 = vsel %vm616, %v1229, %v1233
        %s1235 = scalar_lea.vmem %s2, 160
        %v1236 = vld [vmem:[%s1235] sm:$0xf]
        %v1237 = vld [vmem:[%s1235 + $0x4] sm:$0xf]
        %v1238 = vld [vmem:[%s1235 + $0x8] sm:$0xf]
        %v1239 = vld [vmem:[%s1235 + $0xc] sm:$0xf]
        %v1240 = vld [vmem:[%s1235 + $0x10] sm:$0xf]
        %v1241 = vld [vmem:[%s1235 + $0x14] sm:$0xf]
        %v1242 = vld [vmem:[%s1235 + $0x18] sm:$0xf]
        %v1243 = vld [vmem:[%s1235 + $0x1c] sm:$0xf]
        %v1244 = vunpack.c.l.b16 %v1136
        %v1245 = vunpack.c.l.b16 %v1150
        %v1246 = vunpack.c.l.b16 %v1164
        %v1247 = vunpack.c.l.b16 %v1178
        %v1248 = vunpack.c.l.b16 %v1192
        %v1249 = vunpack.c.l.b16 %v1206
        %v1250 = vunpack.c.l.b16 %v1220
        %v1251 = vunpack.c.l.b16 %v1234
        %v1252 = vpack.c.b16 %v1245, %v1244
        %v1253 = vpack.c.b16 %v1247, %v1246
        %v1254 = vpack.c.b16 %v1249, %v1248
        %v1255 = vpack.c.b16 %v1251, %v1250
        %v1264 = vunpack.c.l.b16 %v1236
        %v1265 = vunpack.c.l.b16 %v1237
        %v1266 = vunpack.c.l.b16 %v1238
        %v1267 = vunpack.c.l.b16 %v1239
        %v1268 = vunpack.c.l.b16 %v1240
        %v1269 = vunpack.c.l.b16 %v1241
        %v1270 = vunpack.c.l.b16 %v1242
        %v1271 = vunpack.c.l.b16 %v1243
        %v1272 = vpack.c.b16 %v1265, %v1264
        %v1273 = vpack.c.b16 %v1267, %v1266
        %v1274 = vpack.c.b16 %v1269, %v1268
        %v1275 = vpack.c.b16 %v1271, %v1270
        %v1281 = vsel %vm402, %v1252, 0
        %v1284 = vsel %vm402, %v1253, 0
        %v1287 = vsel %vm402, %v1254, 0
        %v1290 = vsel %vm402, %v1255, 0
        %1292 = vmatprep.subr.bf16.mxu0 0
        %1293 = vmatpush1.bf16.msra.mxu0 0
        %1294 = vmatprep.subr.bf16.mxu0 0
        %1295 = vmatpush1.bf16.msra.mxu0 0
        %1296 = vmatprep.subr.bf16.mxu0 0
        %1297 = vmatpush1.bf16.msra.mxu0 0
        %1298 = vmatprep.subr.bf16.mxu0 0
        %1299 = vmatpush1.bf16.msra.mxu0 0
        %1300 = vmatprep.subr.bf16.mxu0 0
        %1301 = vmatpush1.bf16.msra.mxu0 %v1275
        %1302 = vmatprep.subr.bf16.mxu0 0
        %1303 = vmatpush1.bf16.msra.mxu0 %v1274
        %1304 = vmatprep.subr.bf16.mxu0 0
        %1305 = vmatpush1.bf16.msra.mxu0 %v1273
        %1306 = vmatprep.subr.bf16.mxu0 0
        %1307 = vmatpush1.bf16.msra.mxu0 %v1272
        %1308 = vmatprep.subr.bf16.mxu0 0
        %1309 = vmatpush2.bf16.msra.mxu0 0
        %1310 = vmatprep.subr.bf16.mxu0 0
        %1311 = vmatpush2.bf16.msra.mxu0 0
        %1312 = vmatprep.subr.bf16.mxu0 0
        %1313 = vmatpush2.bf16.msra.mxu0 0
        %1314 = vmatprep.subr.bf16.mxu0 0
        %1315 = vmatpush2.bf16.msra.mxu0 0
        %1316 = vmatprep.subr.bf16.mxu0 0
        %1317 = vmatpush2.bf16.msra.mxu0 0
        %1318 = vmatprep.subr.bf16.mxu0 0
        %1319 = vmatpush2.bf16.msra.mxu0 0
        %1320 = vmatprep.subr.bf16.mxu0 0
        %1321 = vmatpush2.bf16.msra.mxu0 0
        %1322 = vmatprep.subr.bf16.mxu0 0
        %1323 = vmatpush2.bf16.msra.mxu0 0
        %1324 = vmatprep.mubr.bf16.mxu0 0
        %1325 = vmatmul.mubr.bf16.gmra.mxu0 %v1281
        %v1326 = vpop.f32.mrf.mxu0
        %v1327 = vadd.f32 0.0, %v1326
        %v1328 = vpop.f32.mrf.mxu0
        %v1329 = vpop.f32.mrf.mxu0
        %v1330 = vadd.f32 0.0, %v1329
        %v1331 = vpop.f32.mrf.mxu0
        %1332 = vmatprep.mubr.bf16.mxu0 0
        %1333 = vmatmul.mubr.bf16.gmra.mxu0 %v1284
        %v1334 = vpop.f32.mrf.mxu0
        %v1335 = vadd.f32 0.0, %v1334
        %v1336 = vpop.f32.mrf.mxu0
        %v1337 = vpop.f32.mrf.mxu0
        %v1338 = vadd.f32 0.0, %v1337
        %v1339 = vpop.f32.mrf.mxu0
        %1340 = vmatprep.mubr.bf16.mxu0 0
        %1341 = vmatmul.mubr.bf16.gmra.mxu0 %v1287
        %v1342 = vpop.f32.mrf.mxu0
        %v1343 = vadd.f32 0.0, %v1342
        %v1344 = vpop.f32.mrf.mxu0
        %v1345 = vpop.f32.mrf.mxu0
        %v1346 = vadd.f32 0.0, %v1345
        %v1347 = vpop.f32.mrf.mxu0
        %1348 = vmatprep.mubr.bf16.mxu0 0
        %1349 = vmatmul.mubr.bf16.gmra.mxu0 %v1290
        %v1350 = vpop.f32.mrf.mxu0
        %v1351 = vadd.f32 0.0, %v1350
        %v1352 = vpop.f32.mrf.mxu0
        %v1353 = vpop.f32.mrf.mxu0
        %v1354 = vadd.f32 0.0, %v1353
        %v1355 = vpop.f32.mrf.mxu0
        %1356 = vdwg.mxu0
        %v1357 = vadd.f32 %v1115, %v1327
        %v1358 = vadd.f32 %v1116, %v1330
        %v1359 = vadd.f32 %v1117, %v1335
        %v1360 = vadd.f32 %v1118, %v1338
        %v1361 = vadd.f32 %v1119, %v1343
        %v1362 = vadd.f32 %v1120, %v1346
        %v1363 = vadd.f32 %v1121, %v1351
        %v1364 = vadd.f32 %v1122, %v1354
        %s1365 = scalar_lea.vmem %s2, 192
        %v1366 = vld [vmem:[%s1365] sm:$0xf]
        %v1367 = vld [vmem:[%s1365 + $0x4] sm:$0xf]
        %v1368 = vld [vmem:[%s1365 + $0x8] sm:$0xf]
        %v1369 = vld [vmem:[%s1365 + $0xc] sm:$0xf]
        %v1370 = vld [vmem:[%s1365 + $0x10] sm:$0xf]
        %v1371 = vld [vmem:[%s1365 + $0x14] sm:$0xf]
        %v1372 = vld [vmem:[%s1365 + $0x18] sm:$0xf]
        %v1373 = vld [vmem:[%s1365 + $0x1c] sm:$0xf]
        %v1375 = vunpack.c.l.b16 %v341
        %v1376 = vpack.c.b16 %v368, %v367
        %v1377 = vpack.c.b16 %v370, %v369
        %v1378 = vpack.c.b16 %v372, %v371
        %v1379 = vpack.c.b16 %v1375, %v373
        %v1388 = vunpack.c.l.b16 %v1366
        %v1389 = vunpack.c.l.b16 %v1367
        %v1390 = vunpack.c.l.b16 %v1368
        %v1391 = vunpack.c.l.b16 %v1369
        %v1392 = vunpack.c.l.b16 %v1370
        %v1393 = vunpack.c.l.b16 %v1371
        %v1394 = vunpack.c.l.b16 %v1372
        %v1395 = vunpack.c.l.b16 %v1373
        %v1396 = vpack.c.b16 %v1389, %v1388
        %v1397 = vpack.c.b16 %v1391, %v1390
        %v1398 = vpack.c.b16 %v1393, %v1392
        %v1399 = vpack.c.b16 %v1395, %v1394
        %v1405 = vsel %vm402, %v1376, 0
        %v1408 = vsel %vm402, %v1377, 0
        %v1411 = vsel %vm402, %v1378, 0
        %v1414 = vsel %vm402, %v1379, 0
        %1416 = vmatprep.subr.bf16.mxu0 0
        %1417 = vmatpush1.bf16.msra.mxu0 0
        %1418 = vmatprep.subr.bf16.mxu0 0
        %1419 = vmatpush1.bf16.msra.mxu0 0
        %1420 = vmatprep.subr.bf16.mxu0 0
        %1421 = vmatpush1.bf16.msra.mxu0 0
        %1422 = vmatprep.subr.bf16.mxu0 0
        %1423 = vmatpush1.bf16.msra.mxu0 0
        %1424 = vmatprep.subr.bf16.mxu0 0
        %1425 = vmatpush1.bf16.msra.mxu0 %v1399
        %1426 = vmatprep.subr.bf16.mxu0 0
        %1427 = vmatpush1.bf16.msra.mxu0 %v1398
        %1428 = vmatprep.subr.bf16.mxu0 0
        %1429 = vmatpush1.bf16.msra.mxu0 %v1397
        %1430 = vmatprep.subr.bf16.mxu0 0
        %1431 = vmatpush1.bf16.msra.mxu0 %v1396
        %1432 = vmatprep.subr.bf16.mxu0 0
        %1433 = vmatpush2.bf16.msra.mxu0 0
        %1434 = vmatprep.subr.bf16.mxu0 0
        %1435 = vmatpush2.bf16.msra.mxu0 0
        %1436 = vmatprep.subr.bf16.mxu0 0
        %1437 = vmatpush2.bf16.msra.mxu0 0
        %1438 = vmatprep.subr.bf16.mxu0 0
        %1439 = vmatpush2.bf16.msra.mxu0 0
        %1440 = vmatprep.subr.bf16.mxu0 0
        %1441 = vmatpush2.bf16.msra.mxu0 0
        %1442 = vmatprep.subr.bf16.mxu0 0
        %1443 = vmatpush2.bf16.msra.mxu0 0
        %1444 = vmatprep.subr.bf16.mxu0 0
        %1445 = vmatpush2.bf16.msra.mxu0 0
        %1446 = vmatprep.subr.bf16.mxu0 0
        %1447 = vmatpush2.bf16.msra.mxu0 0
        %1448 = vmatprep.mubr.bf16.mxu0 0
        %1449 = vmatmul.mubr.bf16.gmra.mxu0 %v1405
        %v1450 = vpop.f32.mrf.mxu0
        %v1451 = vadd.f32 0.0, %v1450
        %v1452 = vpop.f32.mrf.mxu0
        %v1453 = vpop.f32.mrf.mxu0
        %v1454 = vadd.f32 0.0, %v1453
        %v1455 = vpop.f32.mrf.mxu0
        %1456 = vmatprep.mubr.bf16.mxu0 0
        %1457 = vmatmul.mubr.bf16.gmra.mxu0 %v1408
        %v1458 = vpop.f32.mrf.mxu0
        %v1459 = vadd.f32 0.0, %v1458
        %v1460 = vpop.f32.mrf.mxu0
        %v1461 = vpop.f32.mrf.mxu0
        %v1462 = vadd.f32 0.0, %v1461
        %v1463 = vpop.f32.mrf.mxu0
        %1464 = vmatprep.mubr.bf16.mxu0 0
        %1465 = vmatmul.mubr.bf16.gmra.mxu0 %v1411
        %v1466 = vpop.f32.mrf.mxu0
        %v1467 = vadd.f32 0.0, %v1466
        %v1468 = vpop.f32.mrf.mxu0
        %v1469 = vpop.f32.mrf.mxu0
        %v1470 = vadd.f32 0.0, %v1469
        %v1471 = vpop.f32.mrf.mxu0
        %1472 = vmatprep.mubr.bf16.mxu0 0
        %1473 = vmatmul.mubr.bf16.gmra.mxu0 %v1414
        %v1474 = vpop.f32.mrf.mxu0
        %v1475 = vadd.f32 0.0, %v1474
        %v1476 = vpop.f32.mrf.mxu0
        %v1477 = vpop.f32.mrf.mxu0
        %v1478 = vadd.f32 0.0, %v1477
        %v1479 = vpop.f32.mrf.mxu0
        %1480 = vdwg.mxu0
        %v1481 = vadd.f32 %v1357, %v1451
        %v1482 = vadd.f32 %v1358, %v1454
        %v1483 = vadd.f32 %v1359, %v1459
        %v1484 = vadd.f32 %v1360, %v1462
        %v1485 = vadd.f32 %v1361, %v1467
        %v1486 = vadd.f32 %v1362, %v1470
        %v1487 = vadd.f32 %v1363, %v1475
        %v1488 = vadd.f32 %v1364, %v1478
        %s1489 = scalar_lea.vmem %s2, 224
        %v1490 = vld [vmem:[%s1489] sm:$0xf]
        %v1491 = vld [vmem:[%s1489 + $0x4] sm:$0xf]
        %v1492 = vld [vmem:[%s1489 + $0x8] sm:$0xf]
        %v1493 = vld [vmem:[%s1489 + $0xc] sm:$0xf]
        %v1494 = vld [vmem:[%s1489 + $0x10] sm:$0xf]
        %v1495 = vld [vmem:[%s1489 + $0x14] sm:$0xf]
        %v1496 = vld [vmem:[%s1489 + $0x18] sm:$0xf]
        %v1497 = vld [vmem:[%s1489 + $0x1c] sm:$0xf]
        %1498 = vrot.lane.b32.xlu0 %v1376, 64
        %v1499 = vpop.permute.xlu0 %1498
        %1500 = vrot.lane.b32.xlu0 %v1377, 64
        %v1501 = vpop.permute.xlu0 %1500
        %1502 = vrot.lane.b32.xlu0 %v1378, 64
        %v1503 = vpop.permute.xlu0 %1502
        %1504 = vrot.lane.b32.xlu0 %v1379, 64
        %v1505 = vpop.permute.xlu0 %1504
        %v1514 = vunpack.c.l.b16 %v1490
        %v1515 = vunpack.c.l.b16 %v1491
        %v1516 = vunpack.c.l.b16 %v1492
        %v1517 = vunpack.c.l.b16 %v1493
        %v1518 = vunpack.c.l.b16 %v1494
        %v1519 = vunpack.c.l.b16 %v1495
        %v1520 = vunpack.c.l.b16 %v1496
        %v1521 = vunpack.c.l.b16 %v1497
        %v1522 = vpack.c.b16 %v1515, %v1514
        %v1523 = vpack.c.b16 %v1517, %v1516
        %v1524 = vpack.c.b16 %v1519, %v1518
        %v1525 = vpack.c.b16 %v1521, %v1520
        %v1531 = vsel %vm402, %v1499, 0
        %v1534 = vsel %vm402, %v1501, 0
        %v1537 = vsel %vm402, %v1503, 0
        %v1540 = vsel %vm402, %v1505, 0
        %1542 = vmatprep.subr.bf16.mxu0 0
        %1543 = vmatpush1.bf16.msra.mxu0 0
        %1544 = vmatprep.subr.bf16.mxu0 0
        %1545 = vmatpush1.bf16.msra.mxu0 0
        %1546 = vmatprep.subr.bf16.mxu0 0
        %1547 = vmatpush1.bf16.msra.mxu0 0
        %1548 = vmatprep.subr.bf16.mxu0 0
        %1549 = vmatpush1.bf16.msra.mxu0 0
        %1550 = vmatprep.subr.bf16.mxu0 0
        %1551 = vmatpush1.bf16.msra.mxu0 %v1525
        %1552 = vmatprep.subr.bf16.mxu0 0
        %1553 = vmatpush1.bf16.msra.mxu0 %v1524
        %1554 = vmatprep.subr.bf16.mxu0 0
        %1555 = vmatpush1.bf16.msra.mxu0 %v1523
        %1556 = vmatprep.subr.bf16.mxu0 0
        %1557 = vmatpush1.bf16.msra.mxu0 %v1522
        %1558 = vmatprep.subr.bf16.mxu0 0
        %1559 = vmatpush2.bf16.msra.mxu0 0
        %1560 = vmatprep.subr.bf16.mxu0 0
        %1561 = vmatpush2.bf16.msra.mxu0 0
        %1562 = vmatprep.subr.bf16.mxu0 0
        %1563 = vmatpush2.bf16.msra.mxu0 0
        %1564 = vmatprep.subr.bf16.mxu0 0
        %1565 = vmatpush2.bf16.msra.mxu0 0
        %1566 = vmatprep.subr.bf16.mxu0 0
        %1567 = vmatpush2.bf16.msra.mxu0 0
        %1568 = vmatprep.subr.bf16.mxu0 0
        %1569 = vmatpush2.bf16.msra.mxu0 0
        %1570 = vmatprep.subr.bf16.mxu0 0
        %1571 = vmatpush2.bf16.msra.mxu0 0
        %1572 = vmatprep.subr.bf16.mxu0 0
        %1573 = vmatpush2.bf16.msra.mxu0 0
        %1574 = vmatprep.mubr.bf16.mxu0 0
        %1575 = vmatmul.mubr.bf16.gmra.mxu0 %v1531
        %v1576 = vpop.f32.mrf.mxu0
        %v1577 = vadd.f32 0.0, %v1576
        %v1578 = vpop.f32.mrf.mxu0
        %v1579 = vpop.f32.mrf.mxu0
        %v1580 = vadd.f32 0.0, %v1579
        %v1581 = vpop.f32.mrf.mxu0
        %1582 = vmatprep.mubr.bf16.mxu0 0
        %1583 = vmatmul.mubr.bf16.gmra.mxu0 %v1534
        %v1584 = vpop.f32.mrf.mxu0
        %v1585 = vadd.f32 0.0, %v1584
        %v1586 = vpop.f32.mrf.mxu0
        %v1587 = vpop.f32.mrf.mxu0
        %v1588 = vadd.f32 0.0, %v1587
        %v1589 = vpop.f32.mrf.mxu0
        %1590 = vmatprep.mubr.bf16.mxu0 0
        %1591 = vmatmul.mubr.bf16.gmra.mxu0 %v1537
        %v1592 = vpop.f32.mrf.mxu0
        %v1593 = vadd.f32 0.0, %v1592
        %v1594 = vpop.f32.mrf.mxu0
        %v1595 = vpop.f32.mrf.mxu0
        %v1596 = vadd.f32 0.0, %v1595
        %v1597 = vpop.f32.mrf.mxu0
        %1598 = vmatprep.mubr.bf16.mxu0 0
        %1599 = vmatmul.mubr.bf16.gmra.mxu0 %v1540
        %v1600 = vpop.f32.mrf.mxu0
        %v1601 = vadd.f32 0.0, %v1600
        %v1602 = vpop.f32.mrf.mxu0
        %v1603 = vpop.f32.mrf.mxu0
        %v1604 = vadd.f32 0.0, %v1603
        %v1605 = vpop.f32.mrf.mxu0
        %1606 = vdwg.mxu0
        %v1607 = vadd.f32 %v1481, %v1577
        %v1608 = vadd.f32 %v1482, %v1580
        %v1609 = vadd.f32 %v1483, %v1585
        %v1610 = vadd.f32 %v1484, %v1588
        %v1611 = vadd.f32 %v1485, %v1593
        %v1612 = vadd.f32 %v1486, %v1596
        %v1613 = vadd.f32 %v1487, %v1601
        %v1614 = vadd.f32 %v1488, %v1604
        %v1616 = vshrl.u32 %v341, 16
        %v1618 = vrot.slane %v1616, 4
        %v1619 = vshll.u32 %v341, 16
        %v1621 = vrot.slane %v1619, 5
        %v1622 = vor.u32 %v1618, %v1621
        %v1623 = vrot.slane %v1622, 4
        %v1625 = vshll.u32 %v342, 16
        %v1627 = vrot.slane %v1625, 5
        %v1628 = vsel %vm616, %v1623, %v1627
        %s1629 = scalar_lea.vmem %s2, 256
        %v1630 = vld [vmem:[%s1629] sm:$0xf]
        %v1631 = vld [vmem:[%s1629 + $0x4] sm:$0xf]
        %v1632 = vld [vmem:[%s1629 + $0x8] sm:$0xf]
        %v1633 = vld [vmem:[%s1629 + $0xc] sm:$0xf]
        %v1634 = vld [vmem:[%s1629 + $0x10] sm:$0xf]
        %v1635 = vld [vmem:[%s1629 + $0x14] sm:$0xf]
        %v1636 = vld [vmem:[%s1629 + $0x18] sm:$0xf]
        %v1637 = vld [vmem:[%s1629 + $0x1c] sm:$0xf]
        %v1638 = vunpack.c.l.b16 %v1628
        %v1639 = vpack.c.b16 %v740, %v739
        %v1640 = vpack.c.b16 %v742, %v741
        %v1641 = vpack.c.b16 %v744, %v743
        %v1642 = vpack.c.b16 %v1638, %v745
        %v1651 = vunpack.c.l.b16 %v1630
        %v1652 = vunpack.c.l.b16 %v1631
        %v1653 = vunpack.c.l.b16 %v1632
        %v1654 = vunpack.c.l.b16 %v1633
        %v1655 = vunpack.c.l.b16 %v1634
        %v1656 = vunpack.c.l.b16 %v1635
        %v1657 = vunpack.c.l.b16 %v1636
        %v1658 = vunpack.c.l.b16 %v1637
        %v1659 = vpack.c.b16 %v1652, %v1651
        %v1660 = vpack.c.b16 %v1654, %v1653
        %v1661 = vpack.c.b16 %v1656, %v1655
        %v1662 = vpack.c.b16 %v1658, %v1657
        %v1668 = vsel %vm402, %v1639, 0
        %v1671 = vsel %vm402, %v1640, 0
        %v1674 = vsel %vm402, %v1641, 0
        %v1677 = vsel %vm402, %v1642, 0
        %1679 = vmatprep.subr.bf16.mxu0 0
        %1680 = vmatpush1.bf16.msra.mxu0 0
        %1681 = vmatprep.subr.bf16.mxu0 0
        %1682 = vmatpush1.bf16.msra.mxu0 0
        %1683 = vmatprep.subr.bf16.mxu0 0
        %1684 = vmatpush1.bf16.msra.mxu0 0
        %1685 = vmatprep.subr.bf16.mxu0 0
        %1686 = vmatpush1.bf16.msra.mxu0 0
        %1687 = vmatprep.subr.bf16.mxu0 0
        %1688 = vmatpush1.bf16.msra.mxu0 %v1662
        %1689 = vmatprep.subr.bf16.mxu0 0
        %1690 = vmatpush1.bf16.msra.mxu0 %v1661
        %1691 = vmatprep.subr.bf16.mxu0 0
        %1692 = vmatpush1.bf16.msra.mxu0 %v1660
        %1693 = vmatprep.subr.bf16.mxu0 0
        %1694 = vmatpush1.bf16.msra.mxu0 %v1659
        %1695 = vmatprep.subr.bf16.mxu0 0
        %1696 = vmatpush2.bf16.msra.mxu0 0
        %1697 = vmatprep.subr.bf16.mxu0 0
        %1698 = vmatpush2.bf16.msra.mxu0 0
        %1699 = vmatprep.subr.bf16.mxu0 0
        %1700 = vmatpush2.bf16.msra.mxu0 0
        %1701 = vmatprep.subr.bf16.mxu0 0
        %1702 = vmatpush2.bf16.msra.mxu0 0
        %1703 = vmatprep.subr.bf16.mxu0 0
        %1704 = vmatpush2.bf16.msra.mxu0 0
        %1705 = vmatprep.subr.bf16.mxu0 0
        %1706 = vmatpush2.bf16.msra.mxu0 0
        %1707 = vmatprep.subr.bf16.mxu0 0
        %1708 = vmatpush2.bf16.msra.mxu0 0
        %1709 = vmatprep.subr.bf16.mxu0 0
        %1710 = vmatpush2.bf16.msra.mxu0 0
        %1711 = vmatprep.mubr.bf16.mxu0 0
        %1712 = vmatmul.mubr.bf16.gmra.mxu0 %v1668
        %v1713 = vpop.f32.mrf.mxu0
        %v1714 = vadd.f32 0.0, %v1713
        %v1715 = vpop.f32.mrf.mxu0
        %v1716 = vpop.f32.mrf.mxu0
        %v1717 = vadd.f32 0.0, %v1716
        %v1718 = vpop.f32.mrf.mxu0
        %1719 = vmatprep.mubr.bf16.mxu0 0
        %1720 = vmatmul.mubr.bf16.gmra.mxu0 %v1671
        %v1721 = vpop.f32.mrf.mxu0
        %v1722 = vadd.f32 0.0, %v1721
        %v1723 = vpop.f32.mrf.mxu0
        %v1724 = vpop.f32.mrf.mxu0
        %v1725 = vadd.f32 0.0, %v1724
        %v1726 = vpop.f32.mrf.mxu0
        %1727 = vmatprep.mubr.bf16.mxu0 0
        %1728 = vmatmul.mubr.bf16.gmra.mxu0 %v1674
        %v1729 = vpop.f32.mrf.mxu0
        %v1730 = vadd.f32 0.0, %v1729
        %v1731 = vpop.f32.mrf.mxu0
        %v1732 = vpop.f32.mrf.mxu0
        %v1733 = vadd.f32 0.0, %v1732
        %v1734 = vpop.f32.mrf.mxu0
        %1735 = vmatprep.mubr.bf16.mxu0 0
        %1736 = vmatmul.mubr.bf16.gmra.mxu0 %v1677
        %v1737 = vpop.f32.mrf.mxu0
        %v1738 = vadd.f32 0.0, %v1737
        %v1739 = vpop.f32.mrf.mxu0
        %v1740 = vpop.f32.mrf.mxu0
        %v1741 = vadd.f32 0.0, %v1740
        %v1742 = vpop.f32.mrf.mxu0
        %1743 = vdwg.mxu0
        %v1744 = vadd.f32 %v1607, %v1714
        %v1745 = vadd.f32 %v1608, %v1717
        %v1746 = vadd.f32 %v1609, %v1722
        %v1747 = vadd.f32 %v1610, %v1725
        %v1748 = vadd.f32 %v1611, %v1730
        %v1749 = vadd.f32 %v1612, %v1733
        %v1750 = vadd.f32 %v1613, %v1738
        %v1751 = vadd.f32 %v1614, %v1741
        %1752 = vst [vmem:[%s270] sm:$0xff] %v1744
        %1753 = vst [vmem:[%s270 + $0x8] sm:$0xff] %v1745
        %1754 = vst [vmem:[%s270 + $0x10] sm:$0xff] %v1746
        %1755 = vst [vmem:[%s270 + $0x18] sm:$0xff] %v1747
        %1756 = vst [vmem:[%s270 + $0x20] sm:$0xff] %v1748
        %1757 = vst [vmem:[%s270 + $0x28] sm:$0xff] %v1749
        %1758 = vst [vmem:[%s270 + $0x30] sm:$0xff] %v1750
        %1759 = vst [vmem:[%s270 + $0x38] sm:$0xff] %v1751
        %s1760 = sand.u32 %s142, 1
        %s1761 = scalar_lea.sflag [#allocation3], %s1760
        %s1762 = sand.u32 %s142, 1
        %s1763 = smul.addr %s1762, 64
        %s1764 = scalar_lea.vmem [#allocation2], %s1763
        // Predicated region
        $region37: #{tpu_custom_call.1} parent=35 // pred_check
          %p1765 = pneg %p152
        $region38: #{tpu_custom_call.1} parent=35 // pred_check_branch
          %1767 = sbr.rel (%p1765) target = $region40
        $region39: #{tpu_custom_call.1} parent=35 // pred_region
          %s1768 = smul.u32 8, %s23
          %s1770 = ssub.s32 1024, 1024
          %1771 = vsyncadd %s1761, %s1770
          %s1772 = smul.addr %s22, 8
          %s1773 = sadd.s32 %s1768, %s1772
          %s1774 = smul.addr %s1773, 128
          %s1775 = scalar_lea.hbm %s4, %s1774
          %s1776 = sshll.u32 %s1764, 4
          %s1777 = int_to_ptr.vmem [resolvable:$true] %s1776
          %1782 = dma.vmem_to_hbm [thread:$0]  %s1777, 1024, %s1775, %s1761, 128, 128, 8
        $region40: #{tpu_custom_call.1} parent=35 // pred_fallthru
          _
      $region36: #{tpu_custom_call.1} parent=5 // pred_fallthru
        _
      %p1783 = scmp.le.s32.totalorder 2, %s13
      // Predicated region
      $region41: #{tpu_custom_call.1} parent=5 // pred_check
        %p1784 = pneg %p1783
      $region42: #{tpu_custom_call.1} parent=5 // pred_check_branch
        %1786 = sbr.rel (%p1784) target = $region44
      $region43: #{tpu_custom_call.1} parent=5 // pred_region
        %s1787 = ssub.s32 %s13, 2
        // Predicated region
        $region45: #{tpu_custom_call.1} parent=43 // pred_check
          %p1788 = pneg %p158
        $region46: #{tpu_custom_call.1} parent=43 // pred_check_branch
          %1790 = sbr.rel (%p1788) target = $region48
        $region47: #{tpu_custom_call.1} parent=43 // pred_region
          %s1791 = sand.u32 %s143, 1
          %s1792 = scalar_lea.sflag [#allocation3], %s1791
          %s1793 = sand.u32 %s143, 1
          %s1794 = smul.addr %s1793, 64
          %s1795 = scalar_lea.vmem [#allocation2], %s1794
          %1796 = dma.done %s1792, 1024
        $region48: #{tpu_custom_call.1} parent=43 // pred_fallthru
          _
      $region44: #{tpu_custom_call.1} parent=5 // pred_fallthru
        _
    $region6: #{tpu_custom_call.1} parent=1 // loop_footer
      %s17 = sadd.s32 1, %s13
    $region7: #{tpu_custom_call.1} parent=1 // loop_footer_branch
      %12 = sbr.rel target = $region3
    $region8: #{tpu_custom_call.1} parent=1 // loop_exit
      _
    %1797 = vsyncpa [#allocation3], 1
    %s1798 = scalar_lea.sflag [#allocation3], 1
    %1799 = vsyncpa %s1798, 1

</llo_original>
